<compile_context>
chip_gen: v7x
topology: tpu7x:2x2x1
jax: 0.10.0
libtpu: 0.0.40
codegen_flags: <defaults>
</compile_context>

<pallas_src>
import functools

import jax
import jax.numpy as jnp
from jax.experimental import pallas as pl
from jax.experimental.pallas import tpu as pltpu


def _round_up(x, m):
    return ((x + m - 1) // m) * m


def _vmem_capacity_bytes():
    try:
        return int(pltpu.get_tpu_info().vmem_capacity_bytes)
    except Exception:
        return 128 << 20  # v5e/v6e default


def _gated_attention_kernel(x_ref, w_ref, b_ref, ww_ref, bw_ref,
                            z_ref, a_ref, m_out_ref, l_out_ref,
                            acc_ref, m_ref, l_ref,
                            *, n_instances, tile_n, l_pad,
                            num_real_tiles, tiles_per_core, needs_row_mask):
    c = pl.program_id(0)                      # core-split axis ("parallel")
    n = pl.program_id(1)                      # instance-tile axis ("arbitrary")
    gtile = c * tiles_per_core + n            # global tile index

    @pl.when(n == 0)
    def _init():
        acc_ref[...] = jnp.zeros_like(acc_ref)
        m_ref[...] = jnp.full_like(m_ref, -1e30)
        l_ref[...] = jnp.zeros_like(l_ref)

    x_bf = x_ref[...]                         # (tile_n, M) bf16, streamed from HBM

    if needs_row_mask:
        rid = jax.lax.broadcasted_iota(jnp.int32, (tile_n, 1), 0)
        rows_left = n_instances - gtile * tile_n     # <= 0 on fully padded tiles
        # Zero OOB rows only on edge / padded tiles (kept off the hot path via
        # lax.cond).  Must happen before BOTH matmuls so undefined block data
        # (possibly NaN) never reaches the MXU (0 * NaN = NaN).
        x_bf = jax.lax.cond(
            gtile >= num_real_tiles - 1,
            lambda xv, r, lim: jnp.where(r < lim, xv, jnp.zeros_like(xv)),
            lambda xv, r, lim: xv,
            x_bf, rid, rows_left)

    # Fused gating MLP: one bf16 MXU matmul for [Wv | Wu], f32 accumulation.
    y = jnp.dot(x_bf, w_ref[...], preferred_element_type=jnp.float32) + b_ref[...]
    v = jnp.tanh(y[:, :l_pad])                              # (tile_n, L_pad)
    u = jax.nn.sigmoid(y[:, l_pad:])                        # (tile_n, L_pad)
    g = v * u

    # Attention scores for this tile (small matvec, f32).
    s = jnp.dot(g, ww_ref[...], preferred_element_type=jnp.float32) + bw_ref[...]
    if needs_row_mask:
        s = jnp.where(rid < rows_left, s, -1e30)            # mask padded rows (cheap)
    s_row = s.T                                             # (K, tile_n) lane-dense

    # Stream raw scores out; exact normalization happens in the XLA wrapper.
    a_ref[0] = s_row

    # Online softmax + Z accumulation (bf16 MXU, f32 accumulate).
    m_prev = m_ref[...]                                     # (K, 1)
    m_new = jnp.maximum(m_prev, jnp.max(s_row, axis=1, keepdims=True))
    corr = jnp.exp(m_prev - m_new)
    p = jnp.exp(s_row - m_new)                              # (K, tile_n)
    l_ref[...] = corr * l_ref[...] + jnp.sum(p, axis=1, keepdims=True)
    acc_ref[...] = corr * acc_ref[...] + jnp.dot(
        p.astype(jnp.bfloat16), x_bf, preferred_element_type=jnp.float32)
    m_ref[...] = m_new

    @pl.when(n == pl.num_programs(1) - 1)
    def _finalize():
        z_ref[0] = acc_ref[...]                             # per-core partial Z
        m_out_ref[0] = m_ref[...]                           # per-core running max
        l_out_ref[0] = l_ref[...]                           # per-core running sum


def gated_attention_wsi_forward(x, wv, bv, wu, bu, ww, bw, wc, bc,
                                *, tile_n=None, num_core_splits=2):
    """Forward pass of GatedAttentionWSI.forward_single.

    x: (N, M) instances x features (f32 or bf16).
    Returns (Y_prob (K, n_labels), A (K, N)) with K == attention_branches == 1.
    """
    N, M = x.shape
    L = wv.shape[1]
    K = ww.shape[1]
    n_labels = wc.shape[1]
    # nn.Linear(M*K) applied to Z of shape (K, M) only type-checks for K == 1,
    # exactly like the PyTorch module.
    assert K == 1, "attention_branches != 1 is unsupported (matches the PyTorch module)"

    lane = 128
    L_pad = _round_up(max(L, lane), lane)
    pad = L_pad - L
    if pad:
        wv = jnp.pad(wv, ((0, 0), (0, pad)))
        wu = jnp.pad(wu, ((0, 0), (0, pad)))
        bv = jnp.pad(bv, (0, pad))
        bu = jnp.pad(bu, (0, pad))
        ww = jnp.pad(ww, ((0, pad), (0, 0)))

    # X streams in bf16 (halves the dominant HBM traffic).
    # TODO(synk): have the upstream feature extractor emit bf16 X directly so
    # this wrapper-side cast isn't an extra HBM round-trip over the bag.
    x_bf = x.astype(jnp.bfloat16)

    # Fused gating weights: one 2*L_pad-column matmul fills the MXU output.
    w_fused = jnp.concatenate([wv, wu], axis=1).astype(jnp.bfloat16)        # (M, 2*L_pad)
    b_fused = jnp.concatenate([bv, bu]).reshape(1, 2 * L_pad).astype(jnp.float32)
    ww_f = ww.astype(jnp.float32)
    bw2 = bw.reshape(1, K).astype(jnp.float32)

    # Generation-aware VMEM budget (v7x: 64 MiB/TC -> ~48 MiB cap; v5e/v6e: ~96 MiB).
    vmem_cap = _vmem_capacity_bytes()
    vmem_budget = max(32 << 20, (vmem_cap * 3) // 4)

    # Tile the instance axis (multiple of 128; last tile may be ragged).
    if N <= lane:
        tile_n = N
    else:
        if tile_n is None:
            target = (4 << 20) // (2 * M)                    # ~4 MiB bf16 X tiles
            cap_rows = (vmem_budget // 2) // (2 * 2 * M)     # 2 double-buffered bf16 tiles
            tile_n = max(lane, min(target, cap_rows, N))
        tile_n = min(int(tile_n), N)
        tile_n = max(lane, (tile_n // lane) * lane)
    num_real_tiles = pl.cdiv(N, tile_n)

    # Split the N reduction over TensorCores via a leading "parallel" grid axis:
    # ~2x on v7x (2 TCs/chip); runs sequentially (harmless) on v5e/v6e.
    splits = max(1, min(int(num_core_splits), num_real_tiles))
    tiles_per_core = pl.cdiv(num_real_tiles, splits)
    num_tiles_padded = splits * tiles_per_core
    ragged = (num_real_tiles * tile_n != N)
    needs_row_mask = ragged or (num_tiles_padded != num_real_tiles)

    kernel = functools.partial(
        _gated_attention_kernel,
        n_instances=N, tile_n=tile_n, l_pad=L_pad,
        num_real_tiles=num_real_tiles, tiles_per_core=tiles_per_core,
        needs_row_mask=needs_row_mask)

    def x_index_map(c, n):
        gt = c * tiles_per_core + n
        # Clamp core-padding tiles to a valid block; their rows are masked in-kernel.
        return (jnp.minimum(gt, num_real_tiles - 1), 0)

    # VMEM estimate: double-buffered bf16 X tiles + (double-buffered) constant
    # weights + streamed score tiles (8x sublane-padded) + accumulators + headroom.
    est = (2 * tile_n * M * 2
           + 2 * (M * 2 * L_pad * 2 + L_pad * K * 4 + 2 * L_pad * 4 + K * 4)
           + 2 * 8 * tile_n * 4
           + 2 * 8 * M * 4
           + (6 << 20))
    vmem_limit = int(min(max(est, 24 << 20), vmem_budget))

    grid_spec = pltpu.PrefetchScalarGridSpec(
        num_scalar_prefetch=0,
        grid=(splits, tiles_per_core),
        in_specs=[
            pl.BlockSpec((tile_n, M), x_index_map),                    # X (bf16, streamed)
            pl.BlockSpec((M, 2 * L_pad), lambda c, n: (0, 0)),         # [Wv | Wu] (bf16)
            pl.BlockSpec((1, 2 * L_pad), lambda c, n: (0, 0)),         # [bv | bu]
            pl.BlockSpec((L_pad, K), lambda c, n: (0, 0)),             # Ww
            pl.BlockSpec((1, K), lambda c, n: (0, 0)),                 # bw
        ],
        out_specs=[
            pl.BlockSpec((1, K, M), lambda c, n: (c, 0, 0)),           # per-core Z partial
            pl.BlockSpec((1, K, tile_n),
                         lambda c, n: (c * tiles_per_core + n, 0, 0)),  # streamed raw scores
            pl.BlockSpec((1, K, 1), lambda c, n: (c, 0, 0)),           # per-core running max
            pl.BlockSpec((1, K, 1), lambda c, n: (c, 0, 0)),           # per-core running sum
        ],
        scratch_shapes=[
            pltpu.VMEM((K, M), jnp.float32),   # Z accumulator
            pltpu.VMEM((K, 1), jnp.float32),   # running max
            pltpu.VMEM((K, 1), jnp.float32),   # running sum
        ],
    )

    z_part, s_tiles, m_part, l_part = pl.pallas_call(
        kernel,
        out_shape=(
            jax.ShapeDtypeStruct((splits, K, M), jnp.float32),
            jax.ShapeDtypeStruct((num_tiles_padded, K, tile_n), jnp.float32),
            jax.ShapeDtypeStruct((splits, K, 1), jnp.float32),
            jax.ShapeDtypeStruct((splits, K, 1), jnp.float32),
        ),
        grid_spec=grid_spec,
        compiler_params=pltpu.CompilerParams(
            dimension_semantics=("parallel", "arbitrary"),
            vmem_limit_bytes=vmem_limit),
    )(x_bf, w_fused, b_fused, ww_f, bw2)

    # Exact flash combine of the per-core partials + softmax normalization
    # (plain XLA epilogue, O(M + N) work; exact divide, no approx reciprocal).
    m_glob = jnp.max(m_part, axis=0)                         # (K, 1)
    scale = jnp.exp(m_part - m_glob)                         # (splits, K, 1)
    l_glob = jnp.sum(scale * l_part, axis=0)                 # (K, 1)
    z = jnp.sum(scale * z_part, axis=0) / l_glob             # (K, M)

    s_all = jnp.transpose(s_tiles, (1, 0, 2)).reshape(K, num_tiles_padded * tile_n)
    a = (jnp.exp(s_all - m_glob) / l_glob)[:, :N]            # (K, N)

    y_prob = z @ wc + bc.reshape(1, n_labels)                # (K, n_labels)
    return y_prob, a


def _reference(x, wv, bv, wu, bu, ww, bw, wc, bc):
    """Pure-JAX reference mirroring PyTorch forward_single (same bf16 MXU feeds)."""
    xb = x.astype(jnp.bfloat16)
    v = jnp.tanh(jnp.dot(xb, wv.astype(jnp.bfloat16),
                         preferred_element_type=jnp.float32) + bv)
    u = jax.nn.sigmoid(jnp.dot(xb, wu.astype(jnp.bfloat16),
                               preferred_element_type=jnp.float32) + bu)
    s = jnp.dot(v * u, ww, preferred_element_type=jnp.float32) + bw    # (N, K)
    a = jax.nn.softmax(s.T, axis=1)                                    # (K, N)
    z = jnp.dot(a.astype(jnp.bfloat16), xb,
                preferred_element_type=jnp.float32)                    # (K, M)
    y = z @ wc + bc.reshape(1, -1)
    return y, a


if __name__ == "__main__":
    # Small shapes consistent with the module (n_features=M, hidden_layer=L,
    # attention_branches=K=1, n_labels=1).  N=300 with tile_n=128 exercises the
    # ragged last tile, the L->128 pad and fused-weight path, the 2-way core
    # split AND a fully-padded core tile.
    N, M, L, K, n_labels = 300, 256, 64, 1, 1

    key = jax.random.PRNGKey(0)
    kx, k1, k2, k3, k4, k5, k6, k7, k8 = jax.random.split(key, 9)

    x = jax.random.normal(kx, (N, M), dtype=jnp.float32)
    wv = jax.random.normal(k1, (M, L), dtype=jnp.float32) * 0.1
    bv = jax.random.normal(k2, (L,), dtype=jnp.float32) * 0.1
    wu = jax.random.normal(k3, (M, L), dtype=jnp.float32) * 0.1
    bu = jax.random.normal(k4, (L,), dtype=jnp.float32) * 0.1
    ww = jax.random.normal(k5, (L, K), dtype=jnp.float32) * 0.1
    bw = jax.random.normal(k6, (K,), dtype=jnp.float32) * 0.1
    wc = jax.random.normal(k7, (K * M, n_labels), dtype=jnp.float32) * 0.1
    bc = jax.random.normal(k8, (n_labels,), dtype=jnp.float32) * 0.1

    # explicit small tiles (multi-tile + ragged + padded-core-tile path)
    y1, a1 = gated_attention_wsi_forward(x, wv, bv, wu, bu, ww, bw, wc, bc,
                                         tile_n=128)
    jax.block_until_ready((y1, a1))
    # auto tile_n path
    y2, a2 = gated_attention_wsi_forward(x, wv, bv, wu, bu, ww, bw, wc, bc)
    jax.block_until_ready((y2, a2))

    y_ref, a_ref = _reference(x, wv, bv, wu, bu, ww, bw, wc, bc)

    assert y1.shape == (K, n_labels) and y2.shape == (K, n_labels)
    assert a1.shape == (K, N) and a2.shape == (K, N)
    assert jnp.allclose(a1, a_ref, atol=2e-3, rtol=2e-3), \
        f"A mismatch (tiled): max abs err {jnp.max(jnp.abs(a1 - a_ref))}"
    assert jnp.allclose(a2, a_ref, atol=2e-3, rtol=2e-3), \
        f"A mismatch (auto): max abs err {jnp.max(jnp.abs(a2 - a_ref))}"
    assert jnp.allclose(y1, y_ref, atol=3e-3, rtol=3e-3), \
        f"Y_prob mismatch (tiled): {y1} vs {y_ref}"
    assert jnp.allclose(y2, y_ref, atol=3e-3, rtol=3e-3), \
        f"Y_prob mismatch (auto): {y2} vs {y_ref}"

    print("KERNEL_OK")
</pallas_src>

<mosaic_0001>
module attributes {stable_mosaic.version = 11 : i64} {
  func.func @_gated_attention_kernel(%arg0: i32, %arg1: i32, %arg2: memref<128x256xbf16, #tpu.memory_space<vmem>>, %arg3: memref<256x256xbf16, #tpu.memory_space<vmem>>, %arg4: memref<1x256xf32, #tpu.memory_space<vmem>>, %arg5: memref<128x1xf32, #tpu.memory_space<vmem>>, %arg6: memref<1x1xf32, #tpu.memory_space<vmem>>, %arg7: memref<1x1x256xf32, #tpu.memory_space<vmem>>, %arg8: memref<1x1x128xf32, #tpu.memory_space<vmem>>, %arg9: memref<1x1x1xf32, #tpu.memory_space<vmem>>, %arg10: memref<1x1x1xf32, #tpu.memory_space<vmem>>, %arg11: memref<1x256xf32, #tpu.memory_space<vmem>>, %arg12: memref<1x1xf32, #tpu.memory_space<vmem>>, %arg13: memref<1x1xf32, #tpu.memory_space<vmem>>) attributes {dimension_semantics = [#tpu.dimension_semantics<parallel>, #tpu.dimension_semantics<arbitrary>], iteration_bounds = array<i64: 2, 2>, scalar_prefetch = 0 : i64, scratch_operands = 3 : i64, tpu.core_type = #tpu.core_type<tc>, window_params = [{transform_indices = @transform_0, window_bounds = array<i64: 128, 256>}, {pipeline_mode = #tpu.pipeline_mode<synchronous>, transform_indices = @transform_1, window_bounds = array<i64: 256, 256>}, {pipeline_mode = #tpu.pipeline_mode<synchronous>, transform_indices = @transform_2, window_bounds = array<i64: 1, 256>}, {pipeline_mode = #tpu.pipeline_mode<synchronous>, transform_indices = @transform_3, window_bounds = array<i64: 128, 1>}, {pipeline_mode = #tpu.pipeline_mode<synchronous>, transform_indices = @transform_4, window_bounds = array<i64: 1, 1>}, {transform_indices = @transform_5, window_bounds = array<i64: 1, 1, 256>}, {transform_indices = @transform_6, window_bounds = array<i64: 1, 1, 128>}, {transform_indices = @transform_7, window_bounds = array<i64: 1, 1, 1>}, {transform_indices = @transform_8, window_bounds = array<i64: 1, 1, 1>}]} {
    %c2_i32 = arith.constant 2 : i32
    %0 = arith.muli %arg0, %c2_i32 : i32
    %1 = arith.addi %0, %arg1 : i32
    %c0_i32 = arith.constant 0 : i32
    %2 = arith.cmpi eq, %arg1, %c0_i32 : i32
    %3 = arith.extui %2 : i1 to i32
    %c0_i32_0 = arith.constant 0 : i32
    %4 = arith.cmpi ne, %3, %c0_i32_0 : i32
    scf.if %4 {
      %cst_34 = arith.constant 0.000000e+00 : f32
      %66 = vector.broadcast %cst_34 : f32 to vector<1x256xf32>
      %c0_35 = arith.constant 0 : index
      %c0_36 = arith.constant 0 : index
      %67 = vector.load %arg11[%c0_35, %c0_36] : memref<1x256xf32, #tpu.memory_space<vmem>>, vector<1x256xf32>
      tpu.vector_store %arg11[%c0_35, %c0_36], %66 {strides = array<i32>} : memref<1x256xf32, #tpu.memory_space<vmem>>, vector<1x256xf32>,
      %cst_37 = arith.constant -1.000000e+30 : f32
      %68 = vector.broadcast %cst_37 : f32 to vector<1x1xf32>
      %c0_38 = arith.constant 0 : index
      %c0_39 = arith.constant 0 : index
      %69 = vector.load %arg12[%c0_38, %c0_39] : memref<1x1xf32, #tpu.memory_space<vmem>>, vector<1x1xf32>
      tpu.vector_store %arg12[%c0_38, %c0_39], %68 {strides = array<i32>} : memref<1x1xf32, #tpu.memory_space<vmem>>, vector<1x1xf32>,
      %cst_40 = arith.constant 0.000000e+00 : f32
      %70 = vector.broadcast %cst_40 : f32 to vector<1x1xf32>
      %c0_41 = arith.constant 0 : index
      %c0_42 = arith.constant 0 : index
      %71 = vector.load %arg13[%c0_41, %c0_42] : memref<1x1xf32, #tpu.memory_space<vmem>>, vector<1x1xf32>
      tpu.vector_store %arg13[%c0_41, %c0_42], %70 {strides = array<i32>} : memref<1x1xf32, #tpu.memory_space<vmem>>, vector<1x1xf32>,
    } else {
    }
    %c0 = arith.constant 0 : index
    %c0_1 = arith.constant 0 : index
    %5 = vector.load %arg2[%c0, %c0_1] : memref<128x256xbf16, #tpu.memory_space<vmem>>, vector<128x256xbf16>
    %6 = tpu.iota {dimensions = array<i32: 0>} : vector<128x1xi32>
    %c128_i32 = arith.constant 128 : i32
    %7 = arith.muli %1, %c128_i32 : i32
    %c300_i32 = arith.constant 300 : i32
    %8 = arith.subi %c300_i32, %7 : i32
    %c2_i32_2 = arith.constant 2 : i32
    %9 = arith.cmpi sge, %1, %c2_i32_2 : i32
    %10 = arith.extui %9 : i1 to i32
    %c0_i32_3 = arith.constant 0 : i32
    %11 = arith.cmpi ne, %10, %c0_i32_3 : i32
    %12 = scf.if %11 -> (vector<128x256xbf16>) {
      %66 = vector.broadcast %8 : i32 to vector<128x1xi32>
      %67 = arith.cmpi slt, %6, %66 : vector<128x1xi32>
      %cst_34 = arith.constant 0.000000e+00 : bf16
      %68 = vector.broadcast %cst_34 : bf16 to vector<128x256xbf16>
      %69 = vector.shape_cast %67 : vector<128x1xi1> to vector<128x1xi1>
      %70 = vector.broadcast %69 : vector<128x1xi1> to vector<128x256xi1>
      %71 = arith.select %70, %5, %68 : vector<128x256xi1>, vector<128x256xbf16>
      scf.yield %71 : vector<128x256xbf16>
    } else {
      scf.yield %5 : vector<128x256xbf16>
    }
    %c0_4 = arith.constant 0 : index
    %c0_5 = arith.constant 0 : index
    %13 = vector.load %arg3[%c0_4, %c0_5] : memref<256x256xbf16, #tpu.memory_space<vmem>>, vector<256x256xbf16>
    %cst = arith.constant dense<0.000000e+00> : vector<128x256xf32>
    %14 = tpu.matmul %12, %13, %cst {dimension_numbers = #tpu.dot_dimension_numbers<[1], [0], [0], [1], [0, 0, 1, 1], [], []>} : vector<128x256xbf16>, vector<256x256xbf16>, vector<128x256xf32> -> vector<128x256xf32>
    %c0_6 = arith.constant 0 : index
    %c0_7 = arith.constant 0 : index
    %15 = vector.load %arg4[%c0_6, %c0_7] : memref<1x256xf32, #tpu.memory_space<vmem>>, vector<1x256xf32>
    %16 = vector.broadcast %15 : vector<1x256xf32> to vector<128x256xf32>
    %17 = arith.addf %14, %16 : vector<128x256xf32>
    %18 = vector.extract_strided_slice %17 {offsets = [0, 0], sizes = [128, 128], strides = [1, 1]} : vector<128x256xf32> to vector<128x128xf32>
    %19 = math.tanh %18 : vector<128x128xf32>
    %20 = vector.extract_strided_slice %17 {offsets = [0, 128], sizes = [128, 128], strides = [1, 1]} : vector<128x256xf32> to vector<128x128xf32>
    %21 = arith.negf %20 : vector<128x128xf32>
    %22 = math.exp %21 : vector<128x128xf32>
    %cst_8 = arith.constant 1.000000e+00 : f32
    %23 = vector.broadcast %cst_8 : f32 to vector<128x128xf32>
    %24 = arith.addf %23, %22 : vector<128x128xf32>
    %25 = arith.divf %23, %24 : vector<128x128xf32>
    %26 = arith.mulf %19, %25 : vector<128x128xf32>
    %c0_9 = arith.constant 0 : index
    %c0_10 = arith.constant 0 : index
    %27 = vector.load %arg5[%c0_9, %c0_10] : memref<128x1xf32, #tpu.memory_space<vmem>>, vector<128x1xf32>
    %cst_11 = arith.constant dense<0.000000e+00> : vector<128x1xf32>
    %28 = tpu.matmul %26, %27, %cst_11 {dimension_numbers = #tpu.dot_dimension_numbers<[1], [0], [0], [1], [0, 0, 1, 1], [], []>} : vector<128x128xf32>, vector<128x1xf32>, vector<128x1xf32> -> vector<128x1xf32>
    %c0_12 = arith.constant 0 : index
    %c0_13 = arith.constant 0 : index
    %29 = vector.load %arg6[%c0_12, %c0_13] : memref<1x1xf32, #tpu.memory_space<vmem>>, vector<1x1xf32>
    %30 = vector.broadcast %29 : vector<1x1xf32> to vector<128x1xf32>
    %31 = arith.addf %28, %30 : vector<128x1xf32>
    %32 = vector.broadcast %8 : i32 to vector<128x1xi32>
    %33 = arith.cmpi slt, %6, %32 : vector<128x1xi32>
    %cst_14 = arith.constant -1.000000e+30 : f32
    %34 = vector.broadcast %cst_14 : f32 to vector<128x1xf32>
    %35 = arith.select %33, %31, %34 : vector<128x1xi1>, vector<128x1xf32>
    %36 = tpu.transpose %35, [1, 0] : vector<128x1xf32> -> vector<1x128xf32>
    %c0_15 = arith.constant 0 : index
    %c0_16 = arith.constant 0 : index
    %c0_17 = arith.constant 0 : index
    %37 = vector.load %arg8[%c0_15, %c0_16, %c0_17] : memref<1x1x128xf32, #tpu.memory_space<vmem>>, vector<1x1x128xf32>
    %38 = vector.shape_cast %37 : vector<1x1x128xf32> to vector<1x128xf32>
    %39 = vector.shape_cast %36 : vector<1x128xf32> to vector<1x1x128xf32>
    tpu.vector_store %arg8[%c0_15, %c0_16, %c0_17], %39 {strides = array<i32>} : memref<1x1x128xf32, #tpu.memory_space<vmem>>, vector<1x1x128xf32>,
    %c0_18 = arith.constant 0 : index
    %c0_19 = arith.constant 0 : index
    %40 = vector.load %arg12[%c0_18, %c0_19] : memref<1x1xf32, #tpu.memory_space<vmem>>, vector<1x1xf32>
    %cst_20 = arith.constant dense<0xFF800000> : vector<1xf32>
    %41 = vector.multi_reduction <maximumf>, %36, %cst_20 [1] : vector<1x128xf32> to vector<1xf32>
    %42 = vector.shape_cast %41 : vector<1xf32> to vector<1x1xf32>
    %43 = arith.maximumf %40, %42 : vector<1x1xf32>
    %44 = arith.subf %40, %43 : vector<1x1xf32>
    %45 = math.exp %44 : vector<1x1xf32>
    %46 = vector.broadcast %43 : vector<1x1xf32> to vector<1x128xf32>
    %47 = arith.subf %36, %46 : vector<1x128xf32>
    %48 = math.exp %47 : vector<1x128xf32>
    %c0_21 = arith.constant 0 : index
    %c0_22 = arith.constant 0 : index
    %49 = vector.load %arg13[%c0_21, %c0_22] : memref<1x1xf32, #tpu.memory_space<vmem>>, vector<1x1xf32>
    %50 = arith.mulf %45, %49 : vector<1x1xf32>
    %cst_23 = arith.constant dense<0.000000e+00> : vector<1xf32>
    %51 = vector.multi_reduction <add>, %48, %cst_23 [1] : vector<1x128xf32> to vector<1xf32>
    %52 = vector.shape_cast %51 : vector<1xf32> to vector<1x1xf32>
    %53 = arith.addf %50, %52 : vector<1x1xf32>
    %c0_24 = arith.constant 0 : index
    %c0_25 = arith.constant 0 : index
    %54 = vector.load %arg13[%c0_24, %c0_25] : memref<1x1xf32, #tpu.memory_space<vmem>>, vector<1x1xf32>
    tpu.vector_store %arg13[%c0_24, %c0_25], %53 {strides = array<i32>} : memref<1x1xf32, #tpu.memory_space<vmem>>, vector<1x1xf32>,
    %c0_26 = arith.constant 0 : index
    %c0_27 = arith.constant 0 : index
    %55 = vector.load %arg11[%c0_26, %c0_27] : memref<1x256xf32, #tpu.memory_space<vmem>>, vector<1x256xf32>
    %56 = vector.broadcast %45 : vector<1x1xf32> to vector<1x256xf32>
    %57 = arith.mulf %56, %55 : vector<1x256xf32>
    %58 = arith.truncf %48 : vector<1x128xf32> to vector<1x128xbf16>
    %cst_28 = arith.constant dense<0.000000e+00> : vector<1x256xf32>
    %59 = tpu.matmul %58, %12, %cst_28 {dimension_numbers = #tpu.dot_dimension_numbers<[1], [0], [0], [1], [0, 0, 1, 1], [], []>} : vector<1x128xbf16>, vector<128x256xbf16>, vector<1x256xf32> -> vector<1x256xf32>
    %60 = arith.addf %57, %59 : vector<1x256xf32>
    %c0_29 = arith.constant 0 : index
    %c0_30 = arith.constant 0 : index
    %61 = vector.load %arg11[%c0_29, %c0_30] : memref<1x256xf32, #tpu.memory_space<vmem>>, vector<1x256xf32>
    tpu.vector_store %arg11[%c0_29, %c0_30], %60 {strides = array<i32>} : memref<1x256xf32, #tpu.memory_space<vmem>>, vector<1x256xf32>,
    %c0_31 = arith.constant 0 : index
    %c0_32 = arith.constant 0 : index
    %62 = vector.load %arg12[%c0_31, %c0_32] : memref<1x1xf32, #tpu.memory_space<vmem>>, vector<1x1xf32>
    tpu.vector_store %arg12[%c0_31, %c0_32], %43 {strides = array<i32>} : memref<1x1xf32, #tpu.memory_space<vmem>>, vector<1x1xf32>,
    %c1_i32 = arith.constant 1 : i32
    %63 = arith.cmpi eq, %arg1, %c1_i32 : i32
    %64 = arith.extui %63 : i1 to i32
    %c0_i32_33 = arith.constant 0 : i32
    %65 = arith.cmpi ne, %64, %c0_i32_33 : i32
    scf.if %65 {
      %c0_34 = arith.constant 0 : index
      %c0_35 = arith.constant 0 : index
      %66 = vector.load %arg11[%c0_34, %c0_35] : memref<1x256xf32, #tpu.memory_space<vmem>>, vector<1x256xf32>
      %c0_36 = arith.constant 0 : index
      %c0_37 = arith.constant 0 : index
      %c0_38 = arith.constant 0 : index
      %67 = vector.load %arg7[%c0_36, %c0_37, %c0_38] : memref<1x1x256xf32, #tpu.memory_space<vmem>>, vector<1x1x256xf32>
      %68 = vector.shape_cast %67 : vector<1x1x256xf32> to vector<1x256xf32>
      %69 = vector.shape_cast %66 : vector<1x256xf32> to vector<1x1x256xf32>
      tpu.vector_store %arg7[%c0_36, %c0_37, %c0_38], %69 {strides = array<i32>} : memref<1x1x256xf32, #tpu.memory_space<vmem>>, vector<1x1x256xf32>,
      %c0_39 = arith.constant 0 : index
      %c0_40 = arith.constant 0 : index
      %70 = vector.load %arg12[%c0_39, %c0_40] : memref<1x1xf32, #tpu.memory_space<vmem>>, vector<1x1xf32>
      %c0_41 = arith.constant 0 : index
      %c0_42 = arith.constant 0 : index
      %c0_43 = arith.constant 0 : index
      %71 = vector.load %arg9[%c0_41, %c0_42, %c0_43] : memref<1x1x1xf32, #tpu.memory_space<vmem>>, vector<1x1x1xf32>
      %72 = vector.shape_cast %71 : vector<1x1x1xf32> to vector<1x1xf32>
      %73 = vector.shape_cast %70 : vector<1x1xf32> to vector<1x1x1xf32>
      tpu.vector_store %arg9[%c0_41, %c0_42, %c0_43], %73 {strides = array<i32>} : memref<1x1x1xf32, #tpu.memory_space<vmem>>, vector<1x1x1xf32>,
      %c0_44 = arith.constant 0 : index
      %c0_45 = arith.constant 0 : index
      %74 = vector.load %arg13[%c0_44, %c0_45] : memref<1x1xf32, #tpu.memory_space<vmem>>, vector<1x1xf32>
      %c0_46 = arith.constant 0 : index
      %c0_47 = arith.constant 0 : index
      %c0_48 = arith.constant 0 : index
      %75 = vector.load %arg10[%c0_46, %c0_47, %c0_48] : memref<1x1x1xf32, #tpu.memory_space<vmem>>, vector<1x1x1xf32>
      %76 = vector.shape_cast %75 : vector<1x1x1xf32> to vector<1x1xf32>
      %77 = vector.shape_cast %74 : vector<1x1xf32> to vector<1x1x1xf32>
      tpu.vector_store %arg10[%c0_46, %c0_47, %c0_48], %77 {strides = array<i32>} : memref<1x1x1xf32, #tpu.memory_space<vmem>>, vector<1x1x1xf32>,
    } else {
    }
    return
  }
  func.func @transform_0(%arg0: i32, %arg1: i32) -> (i32, i32) {
    %c2_i32 = arith.constant 2 : i32
    %0 = arith.muli %arg0, %c2_i32 : i32
    %1 = arith.addi %0, %arg1 : i32
    %c2_i32_0 = arith.constant 2 : i32
    %2 = arith.minsi %1, %c2_i32_0 : i32
    %c0_i32 = arith.constant 0 : i32
    %c0_i32_1 = arith.constant 0 : i32
    return %2, %c0_i32 : i32, i32
  }
  func.func @transform_1(%arg0: i32, %arg1: i32) -> (i32, i32) {
    %c0_i32 = arith.constant 0 : i32
    %c0_i32_0 = arith.constant 0 : i32
    %c0_i32_1 = arith.constant 0 : i32
    return %c0_i32, %c0_i32_0 : i32, i32
  }
  func.func @transform_2(%arg0: i32, %arg1: i32) -> (i32, i32) {
    %c0_i32 = arith.constant 0 : i32
    %c0_i32_0 = arith.constant 0 : i32
    %c0_i32_1 = arith.constant 0 : i32
    return %c0_i32, %c0_i32_0 : i32, i32
  }
  func.func @transform_3(%arg0: i32, %arg1: i32) -> (i32, i32) {
    %c0_i32 = arith.constant 0 : i32
    %c0_i32_0 = arith.constant 0 : i32
    %c0_i32_1 = arith.constant 0 : i32
    return %c0_i32, %c0_i32_0 : i32, i32
  }
  func.func @transform_4(%arg0: i32, %arg1: i32) -> (i32, i32) {
    %c0_i32 = arith.constant 0 : i32
    %c0_i32_0 = arith.constant 0 : i32
    %c0_i32_1 = arith.constant 0 : i32
    return %c0_i32, %c0_i32_0 : i32, i32
  }
  func.func @transform_5(%arg0: i32, %arg1: i32) -> (i32, i32, i32) {
    %c0_i32 = arith.constant 0 : i32
    %c0_i32_0 = arith.constant 0 : i32
    %c0_i32_1 = arith.constant 0 : i32
    return %arg0, %c0_i32, %c0_i32_0 : i32, i32, i32
  }
  func.func @transform_6(%arg0: i32, %arg1: i32) -> (i32, i32, i32) {
    %c2_i32 = arith.constant 2 : i32
    %0 = arith.muli %arg0, %c2_i32 : i32
    %1 = arith.addi %0, %arg1 : i32
    %c0_i32 = arith.constant 0 : i32
    %c0_i32_0 = arith.constant 0 : i32
    %c0_i32_1 = arith.constant 0 : i32
    return %1, %c0_i32, %c0_i32_0 : i32, i32, i32
  }
  func.func @transform_7(%arg0: i32, %arg1: i32) -> (i32, i32, i32) {
    %c0_i32 = arith.constant 0 : i32
    %c0_i32_0 = arith.constant 0 : i32
    %c0_i32_1 = arith.constant 0 : i32
    return %arg0, %c0_i32, %c0_i32_0 : i32, i32, i32
  }
  func.func @transform_8(%arg0: i32, %arg1: i32) -> (i32, i32, i32) {
    %c0_i32 = arith.constant 0 : i32
    %c0_i32_0 = arith.constant 0 : i32
    %c0_i32_1 = arith.constant 0 : i32
    return %arg0, %c0_i32, %c0_i32_0 : i32, i32, i32
  }
}

</mosaic_0001>

<llo_original>
// kernel: tpu_custom_call.1
$region0: #{tpu_custom_call.1}
  #allocation0 [shape = 'u32[]', space=smem, size = 0x4, offset = 0x4, fixed_abs, tag = 'smem constant byte address 0x4 - core index']
  #allocation1 [shape = 'u32[144,128]{1,0:T(1,128)}', space=vmem, size = 0x12000, scoped, tag = 'internal scratch']
  #allocation2 [shape = 'f32[1,256]{1,0:T(1,128)}', space=vmem, size = 0x400, scoped, tag = 'scratch operand']
  #allocation3 [shape = 'f32[1,1]{1,0:T(1,128)}', space=vmem, size = 0x200, scoped, tag = 'scratch operand']
  #allocation4 [shape = 'f32[1,1]{1,0:T(1,128)}', space=vmem, size = 0x200, scoped, tag = 'scratch operand']
  #allocation5 [shape = 'f32[1,1]{1,0:T(1,128)S(1)}', space=vmem, size = 0x200, scoped, tag = 'scoped memory for tpu_custom_call.1']
  %s0 = inlined_call_operand.hbm [shape: bf16[300,256], index: 0, kind: input, shape index: {}]
  %s1 = inlined_call_operand.hbm [shape: bf16[256,256], index: 1, kind: input, shape index: {}]
  %s2 = inlined_call_operand.vmem [shape: f32[1,256], index: 2, kind: input, shape index: {}]
  %s3 = inlined_call_operand.vmem [shape: f32[128,1], index: 3, kind: input, shape index: {}]
  %s4 = inlined_call_operand.<no memory space> [shape: f32[1,1], index: 4, kind: input, shape index: {}]
  %s5 = inlined_call_operand.hbm [shape: f32[2,1,256], index: 5, kind: output, shape index: {0}]
  %s6 = inlined_call_operand.hbm [shape: f32[4,1,128], index: 6, kind: output, shape index: {1}]
  %s7 = inlined_call_operand.vmem [shape: f32[2,1,1], index: 7, kind: output, shape index: {2}]
  %s8 = inlined_call_operand.vmem [shape: f32[2,1,1], index: 8, kind: output, shape index: {3}]
  %9 = xla_tuple %s5, %s6, %s7, %s8
  %s10 = sld [smem:[#allocation0]]
  $region101: #{tpu_custom_call.1} parent=0
    _
  %s12 = ssub.s32 1, %s10
  %s13 = scalar_select 0, %s12, %s10
  %v14 = vstv %s4
  %15 = vst [vmem:[#allocation5] sm:$0x1] %v14
  $region1: #{tpu_custom_call.1} parent=0
    #allocation6 [shape = 'u8[131072]{0}', space=vmem, size = 0x20000, scoped, tag = 'input window, operand 0']
    #allocation7 [shape = 's32[2]{0}', space=sflag, size = 0x8, scoped, tag = 'scoped memory for tpu_custom_call.1']
    #allocation8 [shape = 's32[2]{0}', space=sflag, size = 0x8, scoped, tag = 'scoped memory for tpu_custom_call.1']
    #allocation9 [shape = 'u8[131072]{0}', space=vmem, size = 0x20000, scoped, tag = 'input window, operand 1, single buffered']
    #allocation10 [shape = 's32[1]{0}', space=sflag, size = 0x4, scoped, tag = 'scoped memory for tpu_custom_call.1']
    #allocation11 [shape = 'u8[2048]{0}', space=vmem, size = 0x800, scoped, tag = 'output window, operand 0']
    #allocation12 [shape = 'u8[1024]{0}', space=vmem, size = 0x400, scoped, tag = 'output window, operand 1']
    #allocation13 [shape = 's32[2]{0}', space=sflag, size = 0x8, scoped, tag = 'scoped memory for tpu_custom_call.1']
    %16 = vsyncpa [#allocation7], 0
    %s17 = scalar_lea.sflag [#allocation7], 1
    %18 = vsyncpa %s17, 0
    %19 = vsyncpa [#allocation10], 0
    %20 = vsyncpa [#allocation8], 0
    %s21 = scalar_lea.sflag [#allocation8], 1
    %22 = vsyncpa %s21, 0
    %23 = vsyncpa [#allocation13], 0
    %s24 = scalar_lea.sflag [#allocation13], 1
    %25 = vsyncpa %s24, 0
    loop: start=0, step=1, limit=6
    $region2: #{tpu_custom_call.1} parent=1 // loop_pre_header
      _
    $region3: #{tpu_custom_call.1} parent=1 // loop_header
      %s27 = sphi 0, %s31
      %p28 = scmp.ge.s32.totalorder %s27, 6
      %s34 = sphi 0, %s46
      %s35 = sphi 0, %s42
      %s36 = sphi 0, %s34
      %s37 = sphi 0, %s35
      %s38 = sphi 0, %s36
      %s39 = sphi 0, %s37
      %s57 = sphi 0, %s59
      %s60 = sphi 0, %s57
      %s61 = sphi 0, %s60
      %s77 = sphi 0, %s61
      %s81 = sphi 0, %s81
      %s83 = sphi 0, %s81
      %s84 = sphi 0, %s83
      %s98 = sphi 0, %s84
      %s102 = sphi 0, %s102
      %s104 = sphi 0, %s102
      %s105 = sphi 0, %s104
      %s119 = sphi 0, %s105
      %s123 = sphi 0, %s123
      %s125 = sphi 0, %s123
      %s126 = sphi 0, %s125
      %s140 = sphi 0, %s126
      %s144 = sphi 0, %s144
      %s146 = sphi 0, %s144
      %s147 = sphi 0, %s146
      %s161 = sphi 0, %s147
      %s167 = sphi 0, %s169
      %s170 = sphi 0, %s167
      %s171 = sphi 0, %s170
      %s187 = sphi 0, %s171
      %s197 = sphi 0, %s199
      %s200 = sphi 0, %s197
      %s201 = sphi 0, %s200
      %s217 = sphi 0, %s201
      %s223 = sphi 0, %s225
      %s226 = sphi 0, %s223
      %s227 = sphi 0, %s226
      %s243 = sphi 0, %s227
      %s249 = sphi 0, %s251
      %s252 = sphi 0, %s249
      %s253 = sphi 0, %s252
      %s269 = sphi 0, %s253
    $region4: #{tpu_custom_call.1} parent=1 // loop_header_branch
      %30 = sbr.rel (%p28) target = $region8
    $region5: #{tpu_custom_call.1} parent=1 // loop_body
      %s32 = ssub.s32 %s27, 1
      %s33 = ssub.s32 %s27, 2
      %s40 = sadd.s32 1, %s35
      %p41 = scmp.ge.s32.totalorder %s40, 2
      %s42 = scalar_select %p41, 0, %s40
      %s43 = sadd.s32 1, %s34
      %s44 = scalar_select %p41, %s43, %s34
      %p45 = scmp.ge.s32.totalorder %s44, 2
      %s46 = scalar_select %p45, 0, %s44
      %s47 = smul.u32 %s34, 2
      %s48 = sadd.s32 %s47, %s35
      %p49 = scmp.lt.s32.totalorder %s48, 2
      %s50 = scalar_select %p49, %s48, 2
      %s51 = smul.u32 %s46, 2
      %s52 = sadd.s32 %s51, %s42
      %p53 = scmp.lt.s32.totalorder %s52, 2
      %s54 = scalar_select %p53, %s52, 2
      %s55 = ssub.s32 %s50, %s54
      %p56 = scmp.eq.s32.totalorder %s55, 0
      %s58 = sadd.s32 %s57, 1
      %s59 = scalar_select %p56, %s57, %s58
      %p62 = pneg %p56
      %p63 = scmp.eq.s32.totalorder %s27, 3
      %p64 = por %p62, %p63
      %p65 = scmp.ne.s32.totalorder %s57, %s60
      %p66 = scmp.eq.s32.totalorder %s27, 0
      %p67 = por %p65, %p66
      %p68 = scmp.ne.s32.totalorder %s57, %s60
      %p69 = scmp.eq.s32.totalorder %s32, 3
      %p70 = por %p68, %p69
      %p71 = scmp.ne.s32.totalorder %s60, %s61
      %p72 = scmp.eq.s32.totalorder %s32, 0
      %p73 = por %p71, %p72
      %p74 = scmp.ne.s32.totalorder %s60, %s61
      %p75 = scmp.eq.s32.totalorder %s33, 3
      %p76 = por %p74, %p75
      %p78 = scmp.ne.s32.totalorder %s61, %s77
      %p79 = scmp.eq.s32.totalorder %s33, 0
      %p80 = por %p78, %p79
      %s82 = sadd.s32 %s81, 1
      %p85 = scmp.eq.s32.totalorder %s27, 3
      %p86 = scmp.ne.s32.totalorder %s81, %s83
      %p87 = scmp.eq.s32.totalorder %s27, 0
      %p88 = por %p86, %p87
      %p89 = scmp.ne.s32.totalorder %s81, %s83
      %p90 = scmp.eq.s32.totalorder %s32, 3
      %p91 = por %p89, %p90
      %p92 = scmp.ne.s32.totalorder %s83, %s84
      %p93 = scmp.eq.s32.totalorder %s32, 0
      %p94 = por %p92, %p93
      %p95 = scmp.ne.s32.totalorder %s83, %s84
      %p96 = scmp.eq.s32.totalorder %s33, 3
      %p97 = por %p95, %p96
      %p99 = scmp.ne.s32.totalorder %s84, %s98
      %p100 = scmp.eq.s32.totalorder %s33, 0
      %p101 = por %p99, %p100
      %s103 = sadd.s32 %s102, 1
      %p106 = scmp.eq.s32.totalorder %s27, 3
      %p107 = scmp.ne.s32.totalorder %s102, %s104
      %p108 = scmp.eq.s32.totalorder %s27, 0
      %p109 = por %p107, %p108
      %p110 = scmp.ne.s32.totalorder %s102, %s104
      %p111 = scmp.eq.s32.totalorder %s32, 3
      %p112 = por %p110, %p111
      %p113 = scmp.ne.s32.totalorder %s104, %s105
      %p114 = scmp.eq.s32.totalorder %s32, 0
      %p115 = por %p113, %p114
      %p116 = scmp.ne.s32.totalorder %s104, %s105
      %p117 = scmp.eq.s32.totalorder %s33, 3
      %p118 = por %p116, %p117
      %p120 = scmp.ne.s32.totalorder %s105, %s119
      %p121 = scmp.eq.s32.totalorder %s33, 0
      %p122 = por %p120, %p121
      %s124 = sadd.s32 %s123, 1
      %p127 = scmp.eq.s32.totalorder %s27, 3
      %p128 = scmp.ne.s32.totalorder %s123, %s125
      %p129 = scmp.eq.s32.totalorder %s27, 0
      %p130 = por %p128, %p129
      %p131 = scmp.ne.s32.totalorder %s123, %s125
      %p132 = scmp.eq.s32.totalorder %s32, 3
      %p133 = por %p131, %p132
      %p134 = scmp.ne.s32.totalorder %s125, %s126
      %p135 = scmp.eq.s32.totalorder %s32, 0
      %p136 = por %p134, %p135
      %p137 = scmp.ne.s32.totalorder %s125, %s126
      %p138 = scmp.eq.s32.totalorder %s33, 3
      %p139 = por %p137, %p138
      %p141 = scmp.ne.s32.totalorder %s126, %s140
      %p142 = scmp.eq.s32.totalorder %s33, 0
      %p143 = por %p141, %p142
      %s145 = sadd.s32 %s144, 1
      %p148 = scmp.eq.s32.totalorder %s27, 3
      %p149 = scmp.ne.s32.totalorder %s144, %s146
      %p150 = scmp.eq.s32.totalorder %s27, 0
      %p151 = por %p149, %p150
      %p152 = scmp.ne.s32.totalorder %s144, %s146
      %p153 = scmp.eq.s32.totalorder %s32, 3
      %p154 = por %p152, %p153
      %p155 = scmp.ne.s32.totalorder %s146, %s147
      %p156 = scmp.eq.s32.totalorder %s32, 0
      %p157 = por %p155, %p156
      %p158 = scmp.ne.s32.totalorder %s146, %s147
      %p159 = scmp.eq.s32.totalorder %s33, 3
      %p160 = por %p158, %p159
      %p162 = scmp.ne.s32.totalorder %s147, %s161
      %p163 = scmp.eq.s32.totalorder %s33, 0
      %p164 = por %p162, %p163
      %s165 = ssub.s32 %s34, %s46
      %p166 = scmp.eq.s32.totalorder %s165, 0
      %s168 = sadd.s32 %s167, 1
      %s169 = scalar_select %p166, %s167, %s168
      %p172 = pneg %p166
      %p173 = scmp.eq.s32.totalorder %s27, 3
      %p174 = por %p172, %p173
      %p175 = scmp.ne.s32.totalorder %s167, %s170
      %p176 = scmp.eq.s32.totalorder %s27, 0
      %p177 = por %p175, %p176
      %p178 = scmp.ne.s32.totalorder %s167, %s170
      %p179 = scmp.eq.s32.totalorder %s32, 3
      %p180 = por %p178, %p179
      %p181 = scmp.ne.s32.totalorder %s170, %s171
      %p182 = scmp.eq.s32.totalorder %s32, 0
      %p183 = por %p181, %p182
      %p184 = scmp.ne.s32.totalorder %s170, %s171
      %p185 = scmp.eq.s32.totalorder %s33, 3
      %p186 = por %p184, %p185
      %p188 = scmp.ne.s32.totalorder %s171, %s187
      %p189 = scmp.eq.s32.totalorder %s33, 0
      %p190 = por %p188, %p189
      %s191 = smul.u32 %s34, 2
      %s192 = sadd.s32 %s191, %s35
      %s193 = smul.u32 %s46, 2
      %s194 = sadd.s32 %s193, %s42
      %s195 = ssub.s32 %s192, %s194
      %p196 = scmp.eq.s32.totalorder %s195, 0
      %s198 = sadd.s32 %s197, 1
      %s199 = scalar_select %p196, %s197, %s198
      %p202 = pneg %p196
      %p203 = scmp.eq.s32.totalorder %s27, 3
      %p204 = por %p202, %p203
      %p205 = scmp.ne.s32.totalorder %s197, %s200
      %p206 = scmp.eq.s32.totalorder %s27, 0
      %p207 = por %p205, %p206
      %p208 = scmp.ne.s32.totalorder %s197, %s200
      %p209 = scmp.eq.s32.totalorder %s32, 3
      %p210 = por %p208, %p209
      %p211 = scmp.ne.s32.totalorder %s200, %s201
      %p212 = scmp.eq.s32.totalorder %s32, 0
      %p213 = por %p211, %p212
      %p214 = scmp.ne.s32.totalorder %s200, %s201
      %p215 = scmp.eq.s32.totalorder %s33, 3
      %p216 = por %p214, %p215
      %p218 = scmp.ne.s32.totalorder %s201, %s217
      %p219 = scmp.eq.s32.totalorder %s33, 0
      %p220 = por %p218, %p219
      %s221 = ssub.s32 %s34, %s46
      %p222 = scmp.eq.s32.totalorder %s221, 0
      %s224 = sadd.s32 %s223, 1
      %s225 = scalar_select %p222, %s223, %s224
      %p228 = pneg %p222
      %p229 = scmp.eq.s32.totalorder %s27, 3
      %p230 = por %p228, %p229
      %p231 = scmp.ne.s32.totalorder %s223, %s226
      %p232 = scmp.eq.s32.totalorder %s27, 0
      %p233 = por %p231, %p232
      %p234 = scmp.ne.s32.totalorder %s223, %s226
      %p235 = scmp.eq.s32.totalorder %s32, 3
      %p236 = por %p234, %p235
      %p237 = scmp.ne.s32.totalorder %s226, %s227
      %p238 = scmp.eq.s32.totalorder %s32, 0
      %p239 = por %p237, %p238
      %p240 = scmp.ne.s32.totalorder %s226, %s227
      %p241 = scmp.eq.s32.totalorder %s33, 3
      %p242 = por %p240, %p241
      %p244 = scmp.ne.s32.totalorder %s227, %s243
      %p245 = scmp.eq.s32.totalorder %s33, 0
      %p246 = por %p244, %p245
      %s247 = ssub.s32 %s34, %s46
      %p248 = scmp.eq.s32.totalorder %s247, 0
      %s250 = sadd.s32 %s249, 1
      %s251 = scalar_select %p248, %s249, %s250
      %p254 = pneg %p248
      %p255 = scmp.eq.s32.totalorder %s27, 3
      %p256 = por %p254, %p255
      %p257 = scmp.ne.s32.totalorder %s249, %s252
      %p258 = scmp.eq.s32.totalorder %s27, 0
      %p259 = por %p257, %p258
      %p260 = scmp.ne.s32.totalorder %s249, %s252
      %p261 = scmp.eq.s32.totalorder %s32, 3
      %p262 = por %p260, %p261
      %p263 = scmp.ne.s32.totalorder %s252, %s253
      %p264 = scmp.eq.s32.totalorder %s32, 0
      %p265 = por %p263, %p264
      %p266 = scmp.ne.s32.totalorder %s252, %s253
      %p267 = scmp.eq.s32.totalorder %s33, 3
      %p268 = por %p266, %p267
      %p270 = scmp.ne.s32.totalorder %s253, %s269
      %p271 = scmp.eq.s32.totalorder %s33, 0
      %p272 = por %p270, %p271
      %p273 = scmp.le.s32.totalorder 1, %s27
      %p274 = scmp.lt.s32.totalorder %s27, 5
      %p275 = pnand %p273, %p274
      %p276 = pneg %p275
      // Predicated region
      $region9: #{tpu_custom_call.1} parent=5 // pred_check
        _
      $region10: #{tpu_custom_call.1} parent=5 // pred_check_branch
        %278 = sbr.rel (%p275) target = $region12
      $region11: #{tpu_custom_call.1} parent=5 // pred_region
        %s279 = ssub.s32 %s27, 1
        // Predicated region
        $region13: #{tpu_custom_call.1} parent=11 // pred_check
          %p280 = pneg %p94
        $region14: #{tpu_custom_call.1} parent=11 // pred_check_branch
          %282 = sbr.rel (%p280) target = $region16
        $region15: #{tpu_custom_call.1} parent=11 // pred_region
          %s284 = ssub.s32 4096, 4096
          %285 = vsyncadd [#allocation10], %s284
          %s286 = sshll.u32 [#allocation9], 4
          %s287 = int_to_ptr.vmem [resolvable:$true] %s286
          %292 = dma.hbm_to_vmem [thread:$0]  %s1, 4096, %s287, [#allocation10], 128, 128, 8
        $region16: #{tpu_custom_call.1} parent=11 // pred_fallthru
          _
        // Predicated region
        $region17: #{tpu_custom_call.1} parent=11 // pred_check
          %p293 = pneg %p115
        $region18: #{tpu_custom_call.1} parent=11 // pred_check_branch
          %295 = sbr.rel (%p293) target = $region20
        $region19: #{tpu_custom_call.1} parent=11 // pred_region
          _
        $region20: #{tpu_custom_call.1} parent=11 // pred_fallthru
          _
        // Predicated region
        $region21: #{tpu_custom_call.1} parent=11 // pred_check
          %p296 = pneg %p136
        $region22: #{tpu_custom_call.1} parent=11 // pred_check_branch
          %298 = sbr.rel (%p296) target = $region24
        $region23: #{tpu_custom_call.1} parent=11 // pred_region
          _
        $region24: #{tpu_custom_call.1} parent=11 // pred_fallthru
          _
        // Predicated region
        $region25: #{tpu_custom_call.1} parent=11 // pred_check
          %p299 = pneg %p157
        $region26: #{tpu_custom_call.1} parent=11 // pred_check_branch
          %301 = sbr.rel (%p299) target = $region28
        $region27: #{tpu_custom_call.1} parent=11 // pred_region
          _
        $region28: #{tpu_custom_call.1} parent=11 // pred_fallthru
          _
      $region12: #{tpu_custom_call.1} parent=5 // pred_fallthru
        _
      %p302 = scmp.lt.s32.totalorder %s27, 4
      // Predicated region
      $region29: #{tpu_custom_call.1} parent=5 // pred_check
        %p303 = pneg %p302
      $region30: #{tpu_custom_call.1} parent=5 // pred_check_branch
        %305 = sbr.rel (%p303) target = $region32
      $region31: #{tpu_custom_call.1} parent=5 // pred_region
        // Predicated region
        $region33: #{tpu_custom_call.1} parent=31 // pred_check
          %p306 = pneg %p67
        $region34: #{tpu_custom_call.1} parent=31 // pred_check_branch
          %308 = sbr.rel (%p306) target = $region36
        $region35: #{tpu_custom_call.1} parent=31 // pred_region
          %s309 = sand.u32 %s57, 1
          %s310 = scalar_lea.sflag [#allocation7], %s309
          %s311 = sand.u32 %s57, 1
          %s312 = smul.addr %s311, 128
          %s313 = scalar_lea.vmem [#allocation6], %s312
          %s314 = smul.u32 %s34, 2
          %s315 = sadd.s32 %s314, %s35
          %p316 = scmp.lt.s32.totalorder %s315, 2
          %s317 = scalar_select %p316, %s315, 2
          %s318 = smul.u32 16, %s317
          %s319 = ssub.s32 38, %s318
          %p320 = scmp.lt.s32.totalorder %s319, 16
          %s321 = scalar_select %p320, %s319, 16
          %s322 = smul.u32 64, %s321
          %s323 = smul.u32 %s322, 2
          %s325 = ssub.s32 2048, %s323
          %326 = vsyncadd %s310, %s325
          %p327 = scmp.ne.s32.totalorder 0, %s323
          %s328 = smul.addr %s318, 2
          %s329 = smul.addr %s328, 64
          %s330 = scalar_lea.hbm %s0, %s329
          %s331 = smul.u32 8, %s321
          %s332 = sshll.u32 %s313, 4
          %s333 = int_to_ptr.vmem [resolvable:$true] %s332
          %s334 = sshll.u32 %s331, 4
          %338 = dma.hbm_to_vmem [thread:$0]  (%p327), %s330, %s334, %s333, %s310, 128, 128, 8
        $region36: #{tpu_custom_call.1} parent=31 // pred_fallthru
          _
      $region32: #{tpu_custom_call.1} parent=5 // pred_fallthru
        _
      %p339 = scmp.le.s32.totalorder 1, %s27
      %p340 = scmp.lt.s32.totalorder %s27, 5
      %p341 = pnand %p339, %p340
      %p342 = pneg %p341
      // Predicated region
      $region37: #{tpu_custom_call.1} parent=5 // pred_check
        _
      $region38: #{tpu_custom_call.1} parent=5 // pred_check_branch
        %344 = sbr.rel (%p341) target = $region40
      $region39: #{tpu_custom_call.1} parent=5 // pred_region
        %s345 = ssub.s32 %s27, 1
        %s346 = sand.u32 %s60, 1
        %s347 = scalar_lea.sflag [#allocation7], %s346
        %s348 = sand.u32 %s60, 1
        %s349 = smul.addr %s348, 128
        %s350 = scalar_lea.vmem [#allocation6], %s349
        // Predicated region
        $region41: #{tpu_custom_call.1} parent=39 // pred_check
          %p351 = pneg %p73
        $region42: #{tpu_custom_call.1} parent=39 // pred_check_branch
          %353 = sbr.rel (%p351) target = $region44
        $region43: #{tpu_custom_call.1} parent=39 // pred_region
          %354 = dma.done %s347, 2048
        $region44: #{tpu_custom_call.1} parent=39 // pred_fallthru
          _
        // Predicated region
        $region45: #{tpu_custom_call.1} parent=39 // pred_check
          %p355 = pneg %p94
        $region46: #{tpu_custom_call.1} parent=39 // pred_check_branch
          %357 = sbr.rel (%p355) target = $region48
        $region47: #{tpu_custom_call.1} parent=39 // pred_region
          %358 = dma.done [#allocation10], 4096
        $region48: #{tpu_custom_call.1} parent=39 // pred_fallthru
          _
        %s359 = sand.u32 %s60, 1
        %s360 = scalar_lea.sflag [#allocation7], %s359
        %s361 = sand.u32 %s60, 1
        %s362 = smul.addr %s361, 128
        %s363 = scalar_lea.vmem [#allocation6], %s362
        %p364 = pneg %p73
        %p365 = pneg %p70
        %p366 = pneg %p94
        %p367 = pneg %p91
        %p368 = pneg %p115
        %p369 = pneg %p112
        %p370 = pneg %p136
        %p371 = pneg %p133
        %p372 = pneg %p157
        %p373 = pneg %p154
        %p374 = pneg %p183
        %p375 = pneg %p180
        %s376 = sand.u32 %s170, 1
        %s377 = scalar_lea.sflag [#allocation8], %s376
        %s378 = sand.u32 %s170, 1
        %s379 = smul.addr %s378, 2
        %s380 = scalar_lea.vmem [#allocation11], %s379
        %p381 = pneg %p213
        %p382 = pneg %p210
        %s383 = sand.u32 %s200, 1
        %s384 = scalar_lea.sflag [#allocation13], %s383
        %s385 = sand.u32 %s200, 1
        %s386 = scalar_lea.vmem [#allocation12], %s385
        %p387 = pneg %p239
        %p388 = pneg %p236
        %p389 = scmp.lt.s32.totalorder %s36, 1
        %s390 = scalar_select %p389, %s36, 1
        %s391 = scalar_lea.vmem %s7, %s390
        %p392 = pneg %p265
        %p393 = pneg %p262
        %p394 = scmp.lt.s32.totalorder %s36, 1
        %s395 = scalar_select %p394, %s36, 1
        %s396 = scalar_lea.vmem %s8, %s395
        %s397 = smul.u32 %s36, 2
        %s398 = sadd.s32 %s397, %s37
        %p399 = scmp.lt.s32.totalorder %s398, 2
        %s400 = scalar_select %p399, %s398, 2
        %s401 = smul.u32 16, %s400
        %s402 = ssub.s32 38, %s401
        %p403 = scmp.lt.s32.totalorder %s402, 16
        %s404 = scalar_select %p403, %s402, 16
        %s405 = smul.u32 64, %s404
        %s406 = smul.u32 %s405, 2
        %s407 = smul.u32 %s36, 2
        %s408 = sadd.s32 %s407, %s37
        %p409 = scmp.lt.s32.totalorder %s36, 1
        %s410 = scalar_select %p409, %s36, 1
        %s411 = scalar_lea.vmem %s7, %s410
        %p412 = scmp.lt.s32.totalorder %s36, 1
        %s413 = scalar_select %p412, %s36, 1
        %s414 = scalar_lea.vmem %s8, %s413
        %s416 = smul.u32 %s36, 2
        %s417 = sadd.s32 %s416, %s37
        %p418 = scmp.eq.s32.totalorder %s37, 0
        // Predicated region
        $region49: #{tpu_custom_call.1} parent=39 // pred_check
          %p419 = pneg %p418
        $region50: #{tpu_custom_call.1} parent=39 // pred_check_branch
          %421 = sbr.rel (%p419) target = $region52
        $region51: #{tpu_custom_call.1} parent=39 // pred_region
          %v422 = vlaneseq
          %vm423 = vcmp.ge.s32.totalorder %v422, 0
          %vm424 = vcmp.lt.s32.totalorder %v422, 256
          %vm425 = vmand %vm423, %vm424
          %426 = vst.msk [vmem:[#allocation2] sm:$0x3] %vm425, 0.0
          %vm427 = vcmask 0
          %428 = vst.msk [vmem:[#allocation3] sm:$0x1] %vm427, -1e+30
          %429 = vst.msk [vmem:[#allocation4] sm:$0x1] %vm427, 0.0
        $region52: #{tpu_custom_call.1} parent=39 // pred_fallthru
          _
        %v430 = vld [vmem:[%s350] sm:$0xff]
        %v431 = vld [vmem:[%s350 + $0x8] sm:$0xff]
        %v432 = vld [vmem:[%s350 + $0x10] sm:$0xff]
        %v433 = vld [vmem:[%s350 + $0x18] sm:$0xff]
        %v434 = vld [vmem:[%s350 + $0x20] sm:$0xff]
        %v435 = vld [vmem:[%s350 + $0x28] sm:$0xff]
        %v436 = vld [vmem:[%s350 + $0x30] sm:$0xff]
        %v437 = vld [vmem:[%s350 + $0x38] sm:$0xff]
        %v438 = vld [vmem:[%s350 + $0x40] sm:$0xff]
        %v439 = vld [vmem:[%s350 + $0x48] sm:$0xff]
        %v440 = vld [vmem:[%s350 + $0x50] sm:$0xff]
        %v441 = vld [vmem:[%s350 + $0x58] sm:$0xff]
        %v442 = vld [vmem:[%s350 + $0x60] sm:$0xff]
        %v443 = vld [vmem:[%s350 + $0x68] sm:$0xff]
        %v444 = vld [vmem:[%s350 + $0x70] sm:$0xff]
        %v445 = vld [vmem:[%s350 + $0x78] sm:$0xff]
        %v446 = vlaneseq
        %v447 = vshrl.u32 %v446, 7
        %v448 = vadd.s32 %v447, 8
        %v449 = vadd.s32 %v447, 16
        %v450 = vadd.s32 %v447, 24
        %v451 = vadd.s32 %v447, 32
        %v452 = vadd.s32 %v447, 40
        %v453 = vadd.s32 %v447, 48
        %v454 = vadd.s32 %v447, 56
        %v455 = vadd.s32 %v447, 64
        %v456 = vadd.s32 %v447, 72
        %v457 = vadd.s32 %v447, 80
        %v458 = vadd.s32 %v447, 88
        %v459 = vadd.s32 %v447, 96
        %v460 = vadd.s32 %v447, 104
        %v461 = vadd.s32 %v447, 112
        %v462 = vadd.s32 %v447, 120
        %s463 = smul.u32 %s417, 128
        %s464 = ssub.s32 300, %s463
        %p465 = scmp.ge.s32.totalorder %s417, 2
        // Predicated region
        $region53: #{tpu_custom_call.1} parent=39 // pred_check
          %p466 = pneg %p465
        $region54: #{tpu_custom_call.1} parent=39 // pred_check_branch
          %468 = sbr.rel (%p466) target = $region56
        $region55: #{tpu_custom_call.1} parent=39 // pred_region
          %v469 = vstv %s464
          %vm470 = vcmp.lt.s32.totalorder %v447, %v469
          %vm471 = vcmp.lt.s32.totalorder %v448, %v469
          %vm472 = vcmp.lt.s32.totalorder %v449, %v469
          %vm473 = vcmp.lt.s32.totalorder %v450, %v469
          %vm474 = vcmp.lt.s32.totalorder %v451, %v469
          %vm475 = vcmp.lt.s32.totalorder %v452, %v469
          %vm476 = vcmp.lt.s32.totalorder %v453, %v469
          %vm477 = vcmp.lt.s32.totalorder %v454, %v469
          %vm478 = vcmp.lt.s32.totalorder %v455, %v469
          %vm479 = vcmp.lt.s32.totalorder %v456, %v469
          %vm480 = vcmp.lt.s32.totalorder %v457, %v469
          %vm481 = vcmp.lt.s32.totalorder %v458, %v469
          %vm482 = vcmp.lt.s32.totalorder %v459, %v469
          %vm483 = vcmp.lt.s32.totalorder %v460, %v469
          %vm484 = vcmp.lt.s32.totalorder %v461, %v469
          %vm485 = vcmp.lt.s32.totalorder %v462, %v469
          %v486 = vsel %vm470, 1, 0
          %v487 = vsel %vm471, 1, 0
          %v488 = vsel %vm472, 1, 0
          %v489 = vsel %vm473, 1, 0
          %v490 = vsel %vm474, 1, 0
          %v491 = vsel %vm475, 1, 0
          %v492 = vsel %vm476, 1, 0
          %v493 = vsel %vm477, 1, 0
          %v494 = vsel %vm478, 1, 0
          %v495 = vsel %vm479, 1, 0
          %v496 = vsel %vm480, 1, 0
          %v497 = vsel %vm481, 1, 0
          %v498 = vsel %vm482, 1, 0
          %v499 = vsel %vm483, 1, 0
          %v500 = vsel %vm484, 1, 0
          %v501 = vsel %vm485, 1, 0
          %vm502 = vcmp.eq.s32.totalorder %v486, 1
          %vm503 = vcmp.eq.s32.totalorder %v487, 1
          %vm504 = vcmp.eq.s32.totalorder %v488, 1
          %vm505 = vcmp.eq.s32.totalorder %v489, 1
          %vm506 = vcmp.eq.s32.totalorder %v490, 1
          %vm507 = vcmp.eq.s32.totalorder %v491, 1
          %vm508 = vcmp.eq.s32.totalorder %v492, 1
          %vm509 = vcmp.eq.s32.totalorder %v493, 1
          %vm510 = vcmp.eq.s32.totalorder %v494, 1
          %vm511 = vcmp.eq.s32.totalorder %v495, 1
          %vm512 = vcmp.eq.s32.totalorder %v496, 1
          %vm513 = vcmp.eq.s32.totalorder %v497, 1
          %vm514 = vcmp.eq.s32.totalorder %v498, 1
          %vm515 = vcmp.eq.s32.totalorder %v499, 1
          %vm516 = vcmp.eq.s32.totalorder %v500, 1
          %vm517 = vcmp.eq.s32.totalorder %v501, 1
          %vm518 = vmpackc.low %vm502, %vm502
          %vm519 = vmpackc.low %vm503, %vm503
          %vm520 = vmpackc.low %vm504, %vm504
          %vm521 = vmpackc.low %vm505, %vm505
          %vm522 = vmpackc.low %vm506, %vm506
          %vm523 = vmpackc.low %vm507, %vm507
          %vm524 = vmpackc.low %vm508, %vm508
          %vm525 = vmpackc.low %vm509, %vm509
          %vm526 = vmpackc.low %vm510, %vm510
          %vm527 = vmpackc.low %vm511, %vm511
          %vm528 = vmpackc.low %vm512, %vm512
          %vm529 = vmpackc.low %vm513, %vm513
          %vm530 = vmpackc.low %vm514, %vm514
          %vm531 = vmpackc.low %vm515, %vm515
          %vm532 = vmpackc.low %vm516, %vm516
          %vm533 = vmpackc.low %vm517, %vm517
          %v534 = vsel %vm518, %v430, 0
          %v535 = vsel %vm519, %v431, 0
          %v536 = vsel %vm520, %v432, 0
          %v537 = vsel %vm521, %v433, 0
          %v538 = vsel %vm522, %v434, 0
          %v539 = vsel %vm523, %v435, 0
          %v540 = vsel %vm524, %v436, 0
          %v541 = vsel %vm525, %v437, 0
          %v542 = vsel %vm526, %v438, 0
          %v543 = vsel %vm527, %v439, 0
          %v544 = vsel %vm528, %v440, 0
          %v545 = vsel %vm529, %v441, 0
          %v546 = vsel %vm530, %v442, 0
          %v547 = vsel %vm531, %v443, 0
          %v548 = vsel %vm532, %v444, 0
          %v549 = vsel %vm533, %v445, 0
        $region56: #{tpu_custom_call.1} parent=39 // pred_fallthru
          %v550 = vphi 0, %v534
          %v551 = vphi 0, %v535
          %v552 = vphi 0, %v536
          %v553 = vphi 0, %v537
          %v554 = vphi 0, %v538
          %v555 = vphi 0, %v539
          %v556 = vphi 0, %v540
          %v557 = vphi 0, %v541
          %v558 = vphi 0, %v542
          %v559 = vphi 0, %v543
          %v560 = vphi 0, %v544
          %v561 = vphi 0, %v545
          %v562 = vphi 0, %v546
          %v563 = vphi 0, %v547
          %v564 = vphi 0, %v548
          %v565 = vphi 0, %v549
        %p566 = pneg %p465
        // Predicated region
        $region57: #{tpu_custom_call.1} parent=39 // pred_check
          _
        $region58: #{tpu_custom_call.1} parent=39 // pred_check_branch
          %568 = sbr.rel (%p465) target = $region60
        $region59: #{tpu_custom_call.1} parent=39 // pred_region
          _
        $region60: #{tpu_custom_call.1} parent=39 // pred_fallthru
          %v569 = vphi %v550, %v430
          %v570 = vphi %v551, %v431
          %v571 = vphi %v552, %v432
          %v572 = vphi %v553, %v433
          %v573 = vphi %v554, %v434
          %v574 = vphi %v555, %v435
          %v575 = vphi %v556, %v436
          %v576 = vphi %v557, %v437
          %v577 = vphi %v558, %v438
          %v578 = vphi %v559, %v439
          %v579 = vphi %v560, %v440
          %v580 = vphi %v561, %v441
          %v581 = vphi %v562, %v442
          %v582 = vphi %v563, %v443
          %v583 = vphi %v564, %v444
          %v584 = vphi %v565, %v445
        %v585 = vld [vmem:[#allocation9] sm:$0xff]
        %v586 = vld [vmem:[#allocation9 + $0x8] sm:$0xff]
        %v587 = vld [vmem:[#allocation9 + $0x10] sm:$0xff]
        %v588 = vld [vmem:[#allocation9 + $0x18] sm:$0xff]
        %v589 = vld [vmem:[#allocation9 + $0x20] sm:$0xff]
        %v590 = vld [vmem:[#allocation9 + $0x28] sm:$0xff]
        %v591 = vld [vmem:[#allocation9 + $0x30] sm:$0xff]
        %v592 = vld [vmem:[#allocation9 + $0x38] sm:$0xff]
        %v593 = vld [vmem:[#allocation9 + $0x40] sm:$0xff]
        %v594 = vld [vmem:[#allocation9 + $0x48] sm:$0xff]
        %v595 = vld [vmem:[#allocation9 + $0x50] sm:$0xff]
        %v596 = vld [vmem:[#allocation9 + $0x58] sm:$0xff]
        %v597 = vld [vmem:[#allocation9 + $0x60] sm:$0xff]
        %v598 = vld [vmem:[#allocation9 + $0x68] sm:$0xff]
        %v599 = vld [vmem:[#allocation9 + $0x70] sm:$0xff]
        %v600 = vld [vmem:[#allocation9 + $0x78] sm:$0xff]
        %v601 = vld [vmem:[#allocation9 + $0x80] sm:$0xff]
        %v602 = vld [vmem:[#allocation9 + $0x88] sm:$0xff]
        %v603 = vld [vmem:[#allocation9 + $0x90] sm:$0xff]
        %v604 = vld [vmem:[#allocation9 + $0x98] sm:$0xff]
        %v605 = vld [vmem:[#allocation9 + $0xa0] sm:$0xff]
        %v606 = vld [vmem:[#allocation9 + $0xa8] sm:$0xff]
        %v607 = vld [vmem:[#allocation9 + $0xb0] sm:$0xff]
        %v608 = vld [vmem:[#allocation9 + $0xb8] sm:$0xff]
        %v609 = vld [vmem:[#allocation9 + $0xc0] sm:$0xff]
        %v610 = vld [vmem:[#allocation9 + $0xc8] sm:$0xff]
        %v611 = vld [vmem:[#allocation9 + $0xd0] sm:$0xff]
        %v612 = vld [vmem:[#allocation9 + $0xd8] sm:$0xff]
        %v613 = vld [vmem:[#allocation9 + $0xe0] sm:$0xff]
        %v614 = vld [vmem:[#allocation9 + $0xe8] sm:$0xff]
        %v615 = vld [vmem:[#allocation9 + $0xf0] sm:$0xff]
        %v616 = vld [vmem:[#allocation9 + $0xf8] sm:$0xff]
        %v617 = vld [vmem:[%s2] sm:$0x3]
        %v619 = vlaneseq
        %v620 = vshrl.u32 %v619, 7
        %v621 = vsub.s32 0, %v620
        %v622 = vrot.slane %v617, %v621
        %v623 = vlaneseq
        %v624 = vshrl.u32 %v623, 7
        %v625 = vsub.s32 1, %v624
        %v626 = vrot.slane %v617, %v625
        %v645 = vunpack.c.l.b16 %v569
        %v646 = vunpack.c.h.b16 %v569
        %v647 = vunpack.c.l.b16 %v570
        %v648 = vunpack.c.h.b16 %v570
        %v649 = vunpack.c.l.b16 %v571
        %v650 = vunpack.c.h.b16 %v571
        %v651 = vunpack.c.l.b16 %v572
        %v652 = vunpack.c.h.b16 %v572
        %v653 = vunpack.c.l.b16 %v573
        %v654 = vunpack.c.h.b16 %v573
        %v655 = vunpack.c.l.b16 %v574
        %v656 = vunpack.c.h.b16 %v574
        %v657 = vunpack.c.l.b16 %v575
        %v658 = vunpack.c.h.b16 %v575
        %v659 = vunpack.c.l.b16 %v576
        %v660 = vunpack.c.h.b16 %v576
        %v661 = vunpack.c.l.b16 %v577
        %v662 = vunpack.c.h.b16 %v577
        %v663 = vunpack.c.l.b16 %v578
        %v664 = vunpack.c.h.b16 %v578
        %v665 = vunpack.c.l.b16 %v579
        %v666 = vunpack.c.h.b16 %v579
        %v667 = vunpack.c.l.b16 %v580
        %v668 = vunpack.c.h.b16 %v580
        %v669 = vunpack.c.l.b16 %v581
        %v670 = vunpack.c.h.b16 %v581
        %v671 = vunpack.c.l.b16 %v582
        %v672 = vunpack.c.h.b16 %v582
        %v673 = vunpack.c.l.b16 %v583
        %v674 = vunpack.c.h.b16 %v583
        %v675 = vunpack.c.l.b16 %v584
        %v676 = vunpack.c.h.b16 %v584
        %v677 = vpack.c.b16 %v647, %v645
        %v678 = vpack.c.b16 %v648, %v646
        %v679 = vpack.c.b16 %v651, %v649
        %v680 = vpack.c.b16 %v652, %v650
        %v681 = vpack.c.b16 %v655, %v653
        %v682 = vpack.c.b16 %v656, %v654
        %v683 = vpack.c.b16 %v659, %v657
        %v684 = vpack.c.b16 %v660, %v658
        %v685 = vpack.c.b16 %v663, %v661
        %v686 = vpack.c.b16 %v664, %v662
        %v687 = vpack.c.b16 %v667, %v665
        %v688 = vpack.c.b16 %v668, %v666
        %v689 = vpack.c.b16 %v671, %v669
        %v690 = vpack.c.b16 %v672, %v670
        %v691 = vpack.c.b16 %v675, %v673
        %v692 = vpack.c.b16 %v676, %v674
        %v741 = vunpack.c.l.b16 %v585
        %v742 = vunpack.c.h.b16 %v585
        %v743 = vunpack.c.l.b16 %v586
        %v744 = vunpack.c.h.b16 %v586
        %v745 = vunpack.c.l.b16 %v587
        %v746 = vunpack.c.h.b16 %v587
        %v747 = vunpack.c.l.b16 %v588
        %v748 = vunpack.c.h.b16 %v588
        %v749 = vunpack.c.l.b16 %v589
        %v750 = vunpack.c.h.b16 %v589
        %v751 = vunpack.c.l.b16 %v590
        %v752 = vunpack.c.h.b16 %v590
        %v753 = vunpack.c.l.b16 %v591
        %v754 = vunpack.c.h.b16 %v591
        %v755 = vunpack.c.l.b16 %v592
        %v756 = vunpack.c.h.b16 %v592
        %v757 = vunpack.c.l.b16 %v593
        %v758 = vunpack.c.h.b16 %v593
        %v759 = vunpack.c.l.b16 %v594
        %v760 = vunpack.c.h.b16 %v594
        %v761 = vunpack.c.l.b16 %v595
        %v762 = vunpack.c.h.b16 %v595
        %v763 = vunpack.c.l.b16 %v596
        %v764 = vunpack.c.h.b16 %v596
        %v765 = vunpack.c.l.b16 %v597
        %v766 = vunpack.c.h.b16 %v597
        %v767 = vunpack.c.l.b16 %v598
        %v768 = vunpack.c.h.b16 %v598
        %v769 = vunpack.c.l.b16 %v599
        %v770 = vunpack.c.h.b16 %v599
        %v771 = vunpack.c.l.b16 %v600
        %v772 = vunpack.c.h.b16 %v600
        %v773 = vunpack.c.l.b16 %v601
        %v774 = vunpack.c.h.b16 %v601
        %v775 = vunpack.c.l.b16 %v602
        %v776 = vunpack.c.h.b16 %v602
        %v777 = vunpack.c.l.b16 %v603
        %v778 = vunpack.c.h.b16 %v603
        %v779 = vunpack.c.l.b16 %v604
        %v780 = vunpack.c.h.b16 %v604
        %v781 = vunpack.c.l.b16 %v605
        %v782 = vunpack.c.h.b16 %v605
        %v783 = vunpack.c.l.b16 %v606
        %v784 = vunpack.c.h.b16 %v606
        %v785 = vunpack.c.l.b16 %v607
        %v786 = vunpack.c.h.b16 %v607
        %v787 = vunpack.c.l.b16 %v608
        %v788 = vunpack.c.h.b16 %v608
        %v789 = vunpack.c.l.b16 %v609
        %v790 = vunpack.c.h.b16 %v609
        %v791 = vunpack.c.l.b16 %v610
        %v792 = vunpack.c.h.b16 %v610
        %v793 = vunpack.c.l.b16 %v611
        %v794 = vunpack.c.h.b16 %v611
        %v795 = vunpack.c.l.b16 %v612
        %v796 = vunpack.c.h.b16 %v612
        %v797 = vunpack.c.l.b16 %v613
        %v798 = vunpack.c.h.b16 %v613
        %v799 = vunpack.c.l.b16 %v614
        %v800 = vunpack.c.h.b16 %v614
        %v801 = vunpack.c.l.b16 %v615
        %v802 = vunpack.c.h.b16 %v615
        %v803 = vunpack.c.l.b16 %v616
        %v804 = vunpack.c.h.b16 %v616
        %v805 = vpack.c.b16 %v743, %v741
        %v806 = vpack.c.b16 %v744, %v742
        %v807 = vpack.c.b16 %v747, %v745
        %v808 = vpack.c.b16 %v748, %v746
        %v809 = vpack.c.b16 %v751, %v749
        %v810 = vpack.c.b16 %v752, %v750
        %v811 = vpack.c.b16 %v755, %v753
        %v812 = vpack.c.b16 %v756, %v754
        %v813 = vpack.c.b16 %v759, %v757
        %v814 = vpack.c.b16 %v760, %v758
        %v815 = vpack.c.b16 %v763, %v761
        %v816 = vpack.c.b16 %v764, %v762
        %v817 = vpack.c.b16 %v767, %v765
        %v818 = vpack.c.b16 %v768, %v766
        %v819 = vpack.c.b16 %v771, %v769
        %v820 = vpack.c.b16 %v772, %v770
        %v821 = vpack.c.b16 %v775, %v773
        %v822 = vpack.c.b16 %v776, %v774
        %v823 = vpack.c.b16 %v779, %v777
        %v824 = vpack.c.b16 %v780, %v778
        %v825 = vpack.c.b16 %v783, %v781
        %v826 = vpack.c.b16 %v784, %v782
        %v827 = vpack.c.b16 %v787, %v785
        %v828 = vpack.c.b16 %v788, %v786
        %v829 = vpack.c.b16 %v791, %v789
        %v830 = vpack.c.b16 %v792, %v790
        %v831 = vpack.c.b16 %v795, %v793
        %v832 = vpack.c.b16 %v796, %v794
        %v833 = vpack.c.b16 %v799, %v797
        %v834 = vpack.c.b16 %v800, %v798
        %v835 = vpack.c.b16 %v803, %v801
        %v836 = vpack.c.b16 %v804, %v802
        %869 = vmatprep.subr.bf16.mxu0 %v806
        %870 = vmatpush1.bf16.msra.mxu0 %v805
        %871 = vmatprep.subr.bf16.mxu0 %v808
        %872 = vmatpush1.bf16.msra.mxu0 %v807
        %873 = vmatprep.subr.bf16.mxu0 %v810
        %874 = vmatpush1.bf16.msra.mxu0 %v809
        %875 = vmatprep.subr.bf16.mxu0 %v812
        %876 = vmatpush1.bf16.msra.mxu0 %v811
        %877 = vmatprep.subr.bf16.mxu0 %v814
        %878 = vmatpush1.bf16.msra.mxu0 %v813
        %879 = vmatprep.subr.bf16.mxu0 %v816
        %880 = vmatpush1.bf16.msra.mxu0 %v815
        %881 = vmatprep.subr.bf16.mxu0 %v818
        %882 = vmatpush1.bf16.msra.mxu0 %v817
        %883 = vmatprep.subr.bf16.mxu0 %v820
        %884 = vmatpush1.bf16.msra.mxu0 %v819
        %885 = vmatprep.subr.bf16.mxu0 %v822
        %886 = vmatpush1.bf16.msra.mxu0 %v821
        %887 = vmatprep.subr.bf16.mxu0 %v824
        %888 = vmatpush1.bf16.msra.mxu0 %v823
        %889 = vmatprep.subr.bf16.mxu0 %v826
        %890 = vmatpush1.bf16.msra.mxu0 %v825
        %891 = vmatprep.subr.bf16.mxu0 %v828
        %892 = vmatpush1.bf16.msra.mxu0 %v827
        %893 = vmatprep.subr.bf16.mxu0 %v830
        %894 = vmatpush1.bf16.msra.mxu0 %v829
        %895 = vmatprep.subr.bf16.mxu0 %v832
        %896 = vmatpush1.bf16.msra.mxu0 %v831
        %897 = vmatprep.subr.bf16.mxu0 %v834
        %898 = vmatpush1.bf16.msra.mxu0 %v833
        %899 = vmatprep.subr.bf16.mxu0 %v836
        %900 = vmatpush1.bf16.msra.mxu0 %v835
        %901 = vmatprep.mubr.bf16.mxu0 %v678
        %902 = vmatmul.mubr.bf16.gmra.mrb[0].mxu0 %v677
        %v903 = vpop.f32.mrb[0].mxu0
        %v904 = vadd.f32 %v622, %v903
        %v905 = vpop.f32.mrb[0].mxu0
        %v906 = vadd.f32 %v626, %v905
        %v907 = vpop.f32.mrb[0].mxu0
        %v908 = vadd.f32 %v622, %v907
        %v909 = vpop.f32.mrb[0].mxu0
        %v910 = vadd.f32 %v626, %v909
        %911 = vmatprep.mubr.bf16.mxu0 %v680
        %912 = vmatmul.mubr.bf16.gmra.mrb[0].mxu0 %v679
        %v913 = vpop.f32.mrb[0].mxu0
        %v914 = vadd.f32 %v622, %v913
        %v915 = vpop.f32.mrb[0].mxu0
        %v916 = vadd.f32 %v626, %v915
        %v917 = vpop.f32.mrb[0].mxu0
        %v918 = vadd.f32 %v622, %v917
        %v919 = vpop.f32.mrb[0].mxu0
        %v920 = vadd.f32 %v626, %v919
        %921 = vmatprep.mubr.bf16.mxu0 %v682
        %922 = vmatmul.mubr.bf16.gmra.mrb[0].mxu0 %v681
        %v923 = vpop.f32.mrb[0].mxu0
        %v924 = vadd.f32 %v622, %v923
        %v925 = vpop.f32.mrb[0].mxu0
        %v926 = vadd.f32 %v626, %v925
        %v927 = vpop.f32.mrb[0].mxu0
        %v928 = vadd.f32 %v622, %v927
        %v929 = vpop.f32.mrb[0].mxu0
        %v930 = vadd.f32 %v626, %v929
        %931 = vmatprep.mubr.bf16.mxu0 %v684
        %932 = vmatmul.mubr.bf16.gmra.mrb[0].mxu0 %v683
        %v933 = vpop.f32.mrb[0].mxu0
        %v934 = vadd.f32 %v622, %v933
        %v935 = vpop.f32.mrb[0].mxu0
        %v936 = vadd.f32 %v626, %v935
        %v937 = vpop.f32.mrb[0].mxu0
        %v938 = vadd.f32 %v622, %v937
        %v939 = vpop.f32.mrb[0].mxu0
        %v940 = vadd.f32 %v626, %v939
        %941 = vmatprep.mubr.bf16.mxu0 %v686
        %942 = vmatmul.mubr.bf16.gmra.mrb[0].mxu0 %v685
        %v943 = vpop.f32.mrb[0].mxu0
        %v944 = vadd.f32 %v622, %v943
        %v945 = vpop.f32.mrb[0].mxu0
        %v946 = vadd.f32 %v626, %v945
        %v947 = vpop.f32.mrb[0].mxu0
        %v948 = vadd.f32 %v622, %v947
        %v949 = vpop.f32.mrb[0].mxu0
        %v950 = vadd.f32 %v626, %v949
        %951 = vmatprep.mubr.bf16.mxu0 %v688
        %952 = vmatmul.mubr.bf16.gmra.mrb[0].mxu0 %v687
        %v953 = vpop.f32.mrb[0].mxu0
        %v954 = vadd.f32 %v622, %v953
        %v955 = vpop.f32.mrb[0].mxu0
        %v956 = vadd.f32 %v626, %v955
        %v957 = vpop.f32.mrb[0].mxu0
        %v958 = vadd.f32 %v622, %v957
        %v959 = vpop.f32.mrb[0].mxu0
        %v960 = vadd.f32 %v626, %v959
        %961 = vmatprep.mubr.bf16.mxu0 %v690
        %962 = vmatmul.mubr.bf16.gmra.mrb[0].mxu0 %v689
        %v963 = vpop.f32.mrb[0].mxu0
        %v964 = vadd.f32 %v622, %v963
        %v965 = vpop.f32.mrb[0].mxu0
        %v966 = vadd.f32 %v626, %v965
        %v967 = vpop.f32.mrb[0].mxu0
        %v968 = vadd.f32 %v622, %v967
        %v969 = vpop.f32.mrb[0].mxu0
        %v970 = vadd.f32 %v626, %v969
        %971 = vmatprep.mubr.bf16.mxu0 %v692
        %972 = vmatmul.mubr.bf16.gmra.mrb[0].mxu0 %v691
        %v973 = vpop.f32.mrb[0].mxu0
        %v974 = vadd.f32 %v622, %v973
        %v975 = vpop.f32.mrb[0].mxu0
        %v976 = vadd.f32 %v626, %v975
        %v977 = vpop.f32.mrb[0].mxu0
        %v978 = vadd.f32 %v622, %v977
        %v979 = vpop.f32.mrb[0].mxu0
        %v980 = vadd.f32 %v626, %v979
        %981 = vdwg.mxu0
        %v982 = vtanh.pop %v904
        %v983 = vtanh.pop %v908
        %v984 = vtanh.pop %v914
        %v985 = vtanh.pop %v918
        %v986 = vtanh.pop %v924
        %v987 = vtanh.pop %v928
        %v988 = vtanh.pop %v934
        %v989 = vtanh.pop %v938
        %v990 = vtanh.pop %v944
        %v991 = vtanh.pop %v948
        %v992 = vtanh.pop %v954
        %v993 = vtanh.pop %v958
        %v994 = vtanh.pop %v964
        %v995 = vtanh.pop %v968
        %v996 = vtanh.pop %v974
        %v997 = vtanh.pop %v978
        %v998 = vxor.u32 %v906, 2147483648
        %v999 = vxor.u32 %v910, 2147483648
        %v1000 = vxor.u32 %v916, 2147483648
        %v1001 = vxor.u32 %v920, 2147483648
        %v1002 = vxor.u32 %v926, 2147483648
        %v1003 = vxor.u32 %v930, 2147483648
        %v1004 = vxor.u32 %v936, 2147483648
        %v1005 = vxor.u32 %v940, 2147483648
        %v1006 = vxor.u32 %v946, 2147483648
        %v1007 = vxor.u32 %v950, 2147483648
        %v1008 = vxor.u32 %v956, 2147483648
        %v1009 = vxor.u32 %v960, 2147483648
        %v1010 = vxor.u32 %v966, 2147483648
        %v1011 = vxor.u32 %v970, 2147483648
        %v1012 = vxor.u32 %v976, 2147483648
        %v1013 = vxor.u32 %v980, 2147483648
        %v1014 = vmul.f32 %v998, 1.442695
        %v1015 = vpow.pop %v1014
        %v1016 = vmul.f32 %v999, 1.442695
        %v1017 = vpow.pop %v1016
        %v1018 = vmul.f32 %v1000, 1.442695
        %v1019 = vpow.pop %v1018
        %v1020 = vmul.f32 %v1001, 1.442695
        %v1021 = vpow.pop %v1020
        %v1022 = vmul.f32 %v1002, 1.442695
        %v1023 = vpow.pop %v1022
        %v1024 = vmul.f32 %v1003, 1.442695
        %v1025 = vpow.pop %v1024
        %v1026 = vmul.f32 %v1004, 1.442695
        %v1027 = vpow.pop %v1026
        %v1028 = vmul.f32 %v1005, 1.442695
        %v1029 = vpow.pop %v1028
        %v1030 = vmul.f32 %v1006, 1.442695
        %v1031 = vpow.pop %v1030
        %v1032 = vmul.f32 %v1007, 1.442695
        %v1033 = vpow.pop %v1032
        %v1034 = vmul.f32 %v1008, 1.442695
        %v1035 = vpow.pop %v1034
        %v1036 = vmul.f32 %v1009, 1.442695
        %v1037 = vpow.pop %v1036
        %v1038 = vmul.f32 %v1010, 1.442695
        %v1039 = vpow.pop %v1038
        %v1040 = vmul.f32 %v1011, 1.442695
        %v1041 = vpow.pop %v1040
        %v1042 = vmul.f32 %v1012, 1.442695
        %v1043 = vpow.pop %v1042
        %v1044 = vmul.f32 %v1013, 1.442695
        %v1045 = vpow.pop %v1044
        %v1046 = vadd.f32 %v1015, 1.0
        %v1047 = vadd.f32 %v1017, 1.0
        %v1048 = vadd.f32 %v1019, 1.0
        %v1049 = vadd.f32 %v1021, 1.0
        %v1050 = vadd.f32 %v1023, 1.0
        %v1051 = vadd.f32 %v1025, 1.0
        %v1052 = vadd.f32 %v1027, 1.0
        %v1053 = vadd.f32 %v1029, 1.0
        %v1054 = vadd.f32 %v1031, 1.0
        %v1055 = vadd.f32 %v1033, 1.0
        %v1056 = vadd.f32 %v1035, 1.0
        %v1057 = vadd.f32 %v1037, 1.0
        %v1058 = vadd.f32 %v1039, 1.0
        %v1059 = vadd.f32 %v1041, 1.0
        %v1060 = vadd.f32 %v1043, 1.0
        %v1061 = vadd.f32 %v1045, 1.0
        %v1062 = vrcp.pop %v1046
        %v1063 = vmul.f32 1.0, %v1062
        %v1064 = vrcp.pop %v1047
        %v1065 = vmul.f32 1.0, %v1064
        %v1066 = vrcp.pop %v1048
        %v1067 = vmul.f32 1.0, %v1066
        %v1068 = vrcp.pop %v1049
        %v1069 = vmul.f32 1.0, %v1068
        %v1070 = vrcp.pop %v1050
        %v1071 = vmul.f32 1.0, %v1070
        %v1072 = vrcp.pop %v1051
        %v1073 = vmul.f32 1.0, %v1072
        %v1074 = vrcp.pop %v1052
        %v1075 = vmul.f32 1.0, %v1074
        %v1076 = vrcp.pop %v1053
        %v1077 = vmul.f32 1.0, %v1076
        %v1078 = vrcp.pop %v1054
        %v1079 = vmul.f32 1.0, %v1078
        %v1080 = vrcp.pop %v1055
        %v1081 = vmul.f32 1.0, %v1080
        %v1082 = vrcp.pop %v1056
        %v1083 = vmul.f32 1.0, %v1082
        %v1084 = vrcp.pop %v1057
        %v1085 = vmul.f32 1.0, %v1084
        %v1086 = vrcp.pop %v1058
        %v1087 = vmul.f32 1.0, %v1086
        %v1088 = vrcp.pop %v1059
        %v1089 = vmul.f32 1.0, %v1088
        %v1090 = vrcp.pop %v1060
        %v1091 = vmul.f32 1.0, %v1090
        %v1092 = vrcp.pop %v1061
        %v1093 = vmul.f32 1.0, %v1092
        %v1094 = vmul.f32 %v982, %v1063
        %v1095 = vmul.f32 %v983, %v1065
        %v1096 = vmul.f32 %v984, %v1067
        %v1097 = vmul.f32 %v985, %v1069
        %v1098 = vmul.f32 %v986, %v1071
        %v1099 = vmul.f32 %v987, %v1073
        %v1100 = vmul.f32 %v988, %v1075
        %v1101 = vmul.f32 %v989, %v1077
        %v1102 = vmul.f32 %v990, %v1079
        %v1103 = vmul.f32 %v991, %v1081
        %v1104 = vmul.f32 %v992, %v1083
        %v1105 = vmul.f32 %v993, %v1085
        %v1106 = vmul.f32 %v994, %v1087
        %v1107 = vmul.f32 %v995, %v1089
        %v1108 = vmul.f32 %v996, %v1091
        %v1109 = vmul.f32 %v997, %v1093
        %v1110 = vld [vmem:[%s3] sm:$0xff]
        %v1111 = vld [vmem:[%s3 + $0x8] sm:$0xff]
        %v1112 = vld [vmem:[%s3 + $0x10] sm:$0xff]
        %v1113 = vld [vmem:[%s3 + $0x18] sm:$0xff]
        %v1114 = vld [vmem:[%s3 + $0x20] sm:$0xff]
        %v1115 = vld [vmem:[%s3 + $0x28] sm:$0xff]
        %v1116 = vld [vmem:[%s3 + $0x30] sm:$0xff]
        %v1117 = vld [vmem:[%s3 + $0x38] sm:$0xff]
        %v1118 = vld [vmem:[%s3 + $0x40] sm:$0xff]
        %v1119 = vld [vmem:[%s3 + $0x48] sm:$0xff]
        %v1120 = vld [vmem:[%s3 + $0x50] sm:$0xff]
        %v1121 = vld [vmem:[%s3 + $0x58] sm:$0xff]
        %v1122 = vld [vmem:[%s3 + $0x60] sm:$0xff]
        %v1123 = vld [vmem:[%s3 + $0x68] sm:$0xff]
        %v1124 = vld [vmem:[%s3 + $0x70] sm:$0xff]
        %v1125 = vld [vmem:[%s3 + $0x78] sm:$0xff]
        %v1126 = vld [vmem:[#allocation5] sm:$0x1]
        %v1128 = vlaneseq
        %v1129 = vshrl.u32 %v1128, 7
        %v1130 = vsub.s32 0, %v1129
        %v1131 = vrot.slane %v1126, %v1130
        %1133 = vmatprep.subr.mxu0 0.0
        %1134 = vmatpush1.msra.mxu0 %v1110
        %1135 = vmatprep.subr.mxu0 0.0
        %1136 = vmatpush1.msra.mxu0 %v1111
        %1137 = vmatprep.subr.mxu0 0.0
        %1138 = vmatpush1.msra.mxu0 %v1112
        %1139 = vmatprep.subr.mxu0 0.0
        %1140 = vmatpush1.msra.mxu0 %v1113
        %1141 = vmatprep.subr.mxu0 0.0
        %1142 = vmatpush1.msra.mxu0 %v1114
        %1143 = vmatprep.subr.mxu0 0.0
        %1144 = vmatpush1.msra.mxu0 %v1115
        %1145 = vmatprep.subr.mxu0 0.0
        %1146 = vmatpush1.msra.mxu0 %v1116
        %1147 = vmatprep.subr.mxu0 0.0
        %1148 = vmatpush1.msra.mxu0 %v1117
        %1149 = vmatprep.subr.mxu0 0.0
        %1150 = vmatpush1.msra.mxu0 %v1118
        %1151 = vmatprep.subr.mxu0 0.0
        %1152 = vmatpush1.msra.mxu0 %v1119
        %1153 = vmatprep.subr.mxu0 0.0
        %1154 = vmatpush1.msra.mxu0 %v1120
        %1155 = vmatprep.subr.mxu0 0.0
        %1156 = vmatpush1.msra.mxu0 %v1121
        %1157 = vmatprep.subr.mxu0 0.0
        %1158 = vmatpush1.msra.mxu0 %v1122
        %1159 = vmatprep.subr.mxu0 0.0
        %1160 = vmatpush1.msra.mxu0 %v1123
        %1161 = vmatprep.subr.mxu0 0.0
        %1162 = vmatpush1.msra.mxu0 %v1124
        %1163 = vmatprep.subr.mxu0 0.0
        %1164 = vmatpush1.msra.mxu0 %v1125
        %1165 = vmatprep.subr.mxu0 0.0
        %1166 = vmatpush1.msra.mxu0 0.0
        %1167 = vmatprep.subr.mxu0 0.0
        %1168 = vmatpush1.msra.mxu0 0.0
        %1169 = vmatprep.subr.mxu0 0.0
        %1170 = vmatpush1.msra.mxu0 0.0
        %1171 = vmatprep.subr.mxu0 0.0
        %1172 = vmatpush1.msra.mxu0 0.0
        %1173 = vmatprep.subr.mxu0 0.0
        %1174 = vmatpush1.msra.mxu0 0.0
        %1175 = vmatprep.subr.mxu0 0.0
        %1176 = vmatpush1.msra.mxu0 0.0
        %1177 = vmatprep.subr.mxu0 0.0
        %1178 = vmatpush1.msra.mxu0 0.0
        %1179 = vmatprep.subr.mxu0 0.0
        %1180 = vmatpush1.msra.mxu0 0.0
        %1181 = vmatprep.subr.mxu0 0.0
        %1182 = vmatpush1.msra.mxu0 0.0
        %1183 = vmatprep.subr.mxu0 0.0
        %1184 = vmatpush1.msra.mxu0 0.0
        %1185 = vmatprep.subr.mxu0 0.0
        %1186 = vmatpush1.msra.mxu0 0.0
        %1187 = vmatprep.subr.mxu0 0.0
        %1188 = vmatpush1.msra.mxu0 0.0
        %1189 = vmatprep.subr.mxu0 0.0
        %1190 = vmatpush1.msra.mxu0 0.0
        %1191 = vmatprep.subr.mxu0 0.0
        %1192 = vmatpush1.msra.mxu0 0.0
        %1193 = vmatprep.subr.mxu0 0.0
        %1194 = vmatpush1.msra.mxu0 0.0
        %1195 = vmatprep.subr.mxu0 0.0
        %1196 = vmatpush1.msra.mxu0 0.0
        %1197 = vmatprep.mubr.f32.mxu0 0.0
        %1198 = vmatmul.mubr.f32.gmra.mrb[0].mxu0 %v1094
        %v1199 = vpop.f32.mrb[0].mxu0
        %v1200 = vadd.f32 %v1131, %v1199
        %v1201 = vpop.f32.mrb[0].mxu0
        %1202 = vmatprep.mubr.f32.mxu0 0.0
        %1203 = vmatmul.mubr.f32.gmra.mrb[0].mxu0 %v1095
        %v1204 = vpop.f32.mrb[0].mxu0
        %v1205 = vadd.f32 %v1131, %v1204
        %v1206 = vpop.f32.mrb[0].mxu0
        %1207 = vmatprep.mubr.f32.mxu0 0.0
        %1208 = vmatmul.mubr.f32.gmra.mrb[0].mxu0 %v1096
        %v1209 = vpop.f32.mrb[0].mxu0
        %v1210 = vadd.f32 %v1131, %v1209
        %v1211 = vpop.f32.mrb[0].mxu0
        %1212 = vmatprep.mubr.f32.mxu0 0.0
        %1213 = vmatmul.mubr.f32.gmra.mrb[0].mxu0 %v1097
        %v1214 = vpop.f32.mrb[0].mxu0
        %v1215 = vadd.f32 %v1131, %v1214
        %v1216 = vpop.f32.mrb[0].mxu0
        %1217 = vmatprep.mubr.f32.mxu0 0.0
        %1218 = vmatmul.mubr.f32.gmra.mrb[0].mxu0 %v1098
        %v1219 = vpop.f32.mrb[0].mxu0
        %v1220 = vadd.f32 %v1131, %v1219
        %v1221 = vpop.f32.mrb[0].mxu0
        %1222 = vmatprep.mubr.f32.mxu0 0.0
        %1223 = vmatmul.mubr.f32.gmra.mrb[0].mxu0 %v1099
        %v1224 = vpop.f32.mrb[0].mxu0
        %v1225 = vadd.f32 %v1131, %v1224
        %v1226 = vpop.f32.mrb[0].mxu0
        %1227 = vmatprep.mubr.f32.mxu0 0.0
        %1228 = vmatmul.mubr.f32.gmra.mrb[0].mxu0 %v1100
        %v1229 = vpop.f32.mrb[0].mxu0
        %v1230 = vadd.f32 %v1131, %v1229
        %v1231 = vpop.f32.mrb[0].mxu0
        %1232 = vmatprep.mubr.f32.mxu0 0.0
        %1233 = vmatmul.mubr.f32.gmra.mrb[0].mxu0 %v1101
        %v1234 = vpop.f32.mrb[0].mxu0
        %v1235 = vadd.f32 %v1131, %v1234
        %v1236 = vpop.f32.mrb[0].mxu0
        %1237 = vmatprep.mubr.f32.mxu0 0.0
        %1238 = vmatmul.mubr.f32.gmra.mrb[0].mxu0 %v1102
        %v1239 = vpop.f32.mrb[0].mxu0
        %v1240 = vadd.f32 %v1131, %v1239
        %v1241 = vpop.f32.mrb[0].mxu0
        %1242 = vmatprep.mubr.f32.mxu0 0.0
        %1243 = vmatmul.mubr.f32.gmra.mrb[0].mxu0 %v1103
        %v1244 = vpop.f32.mrb[0].mxu0
        %v1245 = vadd.f32 %v1131, %v1244
        %v1246 = vpop.f32.mrb[0].mxu0
        %1247 = vmatprep.mubr.f32.mxu0 0.0
        %1248 = vmatmul.mubr.f32.gmra.mrb[0].mxu0 %v1104
        %v1249 = vpop.f32.mrb[0].mxu0
        %v1250 = vadd.f32 %v1131, %v1249
        %v1251 = vpop.f32.mrb[0].mxu0
        %1252 = vmatprep.mubr.f32.mxu0 0.0
        %1253 = vmatmul.mubr.f32.gmra.mrb[0].mxu0 %v1105
        %v1254 = vpop.f32.mrb[0].mxu0
        %v1255 = vadd.f32 %v1131, %v1254
        %v1256 = vpop.f32.mrb[0].mxu0
        %1257 = vmatprep.mubr.f32.mxu0 0.0
        %1258 = vmatmul.mubr.f32.gmra.mrb[0].mxu0 %v1106
        %v1259 = vpop.f32.mrb[0].mxu0
        %v1260 = vadd.f32 %v1131, %v1259
        %v1261 = vpop.f32.mrb[0].mxu0
        %1262 = vmatprep.mubr.f32.mxu0 0.0
        %1263 = vmatmul.mubr.f32.gmra.mrb[0].mxu0 %v1107
        %v1264 = vpop.f32.mrb[0].mxu0
        %v1265 = vadd.f32 %v1131, %v1264
        %v1266 = vpop.f32.mrb[0].mxu0
        %1267 = vmatprep.mubr.f32.mxu0 0.0
        %1268 = vmatmul.mubr.f32.gmra.mrb[0].mxu0 %v1108
        %v1269 = vpop.f32.mrb[0].mxu0
        %v1270 = vadd.f32 %v1131, %v1269
        %v1271 = vpop.f32.mrb[0].mxu0
        %1272 = vmatprep.mubr.f32.mxu0 0.0
        %1273 = vmatmul.mubr.f32.gmra.mrb[0].mxu0 %v1109
        %v1274 = vpop.f32.mrb[0].mxu0
        %v1275 = vadd.f32 %v1131, %v1274
        %v1276 = vpop.f32.mrb[0].mxu0
        %1277 = vdwg.mxu0
        %v1278 = vstv %s464
        %vm1279 = vcmp.lt.s32.totalorder %v447, %v1278
        %vm1280 = vcmp.lt.s32.totalorder %v448, %v1278
        %vm1281 = vcmp.lt.s32.totalorder %v449, %v1278
        %vm1282 = vcmp.lt.s32.totalorder %v450, %v1278
        %vm1283 = vcmp.lt.s32.totalorder %v451, %v1278
        %vm1284 = vcmp.lt.s32.totalorder %v452, %v1278
        %vm1285 = vcmp.lt.s32.totalorder %v453, %v1278
        %vm1286 = vcmp.lt.s32.totalorder %v454, %v1278
        %vm1287 = vcmp.lt.s32.totalorder %v455, %v1278
        %vm1288 = vcmp.lt.s32.totalorder %v456, %v1278
        %vm1289 = vcmp.lt.s32.totalorder %v457, %v1278
        %vm1290 = vcmp.lt.s32.totalorder %v458, %v1278
        %vm1291 = vcmp.lt.s32.totalorder %v459, %v1278
        %vm1292 = vcmp.lt.s32.totalorder %v460, %v1278
        %vm1293 = vcmp.lt.s32.totalorder %v461, %v1278
        %vm1294 = vcmp.lt.s32.totalorder %v462, %v1278
        %v1295 = vsel %vm1279, %v1200, -1e+30
        %v1296 = vsel %vm1280, %v1205, -1e+30
        %v1297 = vsel %vm1281, %v1210, -1e+30
        %v1298 = vsel %vm1282, %v1215, -1e+30
        %v1299 = vsel %vm1283, %v1220, -1e+30
        %v1300 = vsel %vm1284, %v1225, -1e+30
        %v1301 = vsel %vm1285, %v1230, -1e+30
        %v1302 = vsel %vm1286, %v1235, -1e+30
        %v1303 = vsel %vm1287, %v1240, -1e+30
        %v1304 = vsel %vm1288, %v1245, -1e+30
        %v1305 = vsel %vm1289, %v1250, -1e+30
        %v1306 = vsel %vm1290, %v1255, -1e+30
        %v1307 = vsel %vm1291, %v1260, -1e+30
        %v1308 = vsel %vm1292, %v1265, -1e+30
        %v1309 = vsel %vm1293, %v1270, -1e+30
        %v1310 = vsel %vm1294, %v1275, -1e+30
        %1311 = vxpose.xlu0.b32.start [1/16] %v1295, 128
        %1312 = vxpose.xlu0.b32.cont [2/16] %v1296, 128
        %1313 = vxpose.xlu0.b32.cont [3/16] %v1297, 128
        %1314 = vxpose.xlu0.b32.cont [4/16] %v1298, 128
        %1315 = vxpose.xlu0.b32.cont [5/16] %v1299, 128
        %1316 = vxpose.xlu0.b32.cont [6/16] %v1300, 128
        %1317 = vxpose.xlu0.b32.cont [7/16] %v1301, 128
        %1318 = vxpose.xlu0.b32.cont [8/16] %v1302, 128
        %1319 = vxpose.xlu0.b32.cont [9/16] %v1303, 128
        %1320 = vxpose.xlu0.b32.cont [10/16] %v1304, 128
        %1321 = vxpose.xlu0.b32.cont [11/16] %v1305, 128
        %1322 = vxpose.xlu0.b32.cont [12/16] %v1306, 128
        %1323 = vxpose.xlu0.b32.cont [13/16] %v1307, 128
        %1324 = vxpose.xlu0.b32.cont [14/16] %v1308, 128
        %1325 = vxpose.xlu0.b32.cont [15/16] %v1309, 128
        %1326 = vxpose.xlu0.b32.end [16/16] %v1310, 128
        %v1327 = vpop.trf.xlu0
        %v1328 = vpop.trf.xlu0
        %v1329 = vpop.trf.xlu0
        %v1330 = vpop.trf.xlu0
        %v1331 = vpop.trf.xlu0
        %v1332 = vpop.trf.xlu0
        %v1333 = vpop.trf.xlu0
        %v1334 = vpop.trf.xlu0
        %v1335 = vpop.trf.xlu0
        %v1336 = vpop.trf.xlu0
        %v1337 = vpop.trf.xlu0
        %v1338 = vpop.trf.xlu0
        %v1339 = vpop.trf.xlu0
        %v1340 = vpop.trf.xlu0
        %v1341 = vpop.trf.xlu0
        %v1342 = vpop.trf.xlu0
        %1343 = vst [vmem:[%s386] sm:$0x1] %v1327
        %v1344 = vld [vmem:[#allocation3] sm:$0x1]
        %vm1345 = vcmask 1040384
        %v1346 = vsel %vm1345, %v1327, -inf
        %1347 = vmax.xlane.f32.xlu0 %v1346
        %v1348 = vpop.xlane.xlu0 %1347
        %v1349 = vmax.f32 %v1344, %v1348
        %v1350 = vsub.f32 %v1344, %v1349
        %v1351 = vmul.f32 %v1350, 1.442695
        %v1352 = vpow.pop %v1351
        %1354 = vset.pattern.permute.xlu0 0
        %1355 = vperm.xlu0 %1354, %v1349
        %v1356 = vpop.permute.xlu0 %1355
        %v1358 = vlaneseq
        %v1359 = vshrl.u32 %v1358, 7
        %v1360 = vsub.s32 0, %v1359
        %v1361 = vrot.slane %v1356, %v1360
        %v1362 = vsub.f32 %v1327, %v1361
        %v1363 = vmul.f32 %v1362, 1.442695
        %v1364 = vpow.pop %v1363
        %v1365 = vld [vmem:[#allocation4] sm:$0x1]
        %v1366 = vmul.f32 %v1352, %v1365
        %v1367 = vsel %vm1345, %v1364, 0.0
        %1368 = vadd.xlane.f32.xlu0 %v1367
        %v1369 = vpop.xlane.xlu0 %1368
        %v1370 = vadd.f32 %v1366, %v1369
        %vm1371 = vcmask 0
        %1372 = vst.msk [vmem:[#allocation4] sm:$0x1] %vm1371, %v1370
        %v1373 = vld [vmem:[#allocation2] sm:$0x3]
        %1375 = vset.pattern.permute.xlu0 0
        %1376 = vperm.xlu0 %1375, %v1352
        %v1377 = vpop.permute.xlu0 %1376
        %v1379 = vlaneseq
        %v1380 = vshrl.u32 %v1379, 7
        %v1381 = vsub.s32 0, %v1380
        %v1382 = vrot.slane %v1377, %v1381
        %v1383 = vmul.f32 %v1382, %v1373
        %v1384 = vpack.c.bf16 %v1364, %v1364
        %1385 = vmatprep.subr.bf16.mxu0 %v678
        %1386 = vmatpush1.bf16.msra.mxu0 %v677
        %1387 = vmatprep.subr.bf16.mxu0 %v680
        %1388 = vmatpush1.bf16.msra.mxu0 %v679
        %1389 = vmatprep.subr.bf16.mxu0 %v682
        %1390 = vmatpush1.bf16.msra.mxu0 %v681
        %1391 = vmatprep.subr.bf16.mxu0 %v684
        %1392 = vmatpush1.bf16.msra.mxu0 %v683
        %1393 = vmatprep.subr.bf16.mxu0 %v686
        %1394 = vmatpush1.bf16.msra.mxu0 %v685
        %1395 = vmatprep.subr.bf16.mxu0 %v688
        %1396 = vmatpush1.bf16.msra.mxu0 %v687
        %1397 = vmatprep.subr.bf16.mxu0 %v690
        %1398 = vmatpush1.bf16.msra.mxu0 %v689
        %1399 = vmatprep.subr.bf16.mxu0 %v692
        %1400 = vmatpush1.bf16.msra.mxu0 %v691
        %1401 = vmatprep.subr.bf16.mxu0 0
        %1402 = vmatpush1.bf16.msra.mxu0 0
        %1403 = vmatprep.subr.bf16.mxu0 0
        %1404 = vmatpush1.bf16.msra.mxu0 0
        %1405 = vmatprep.subr.bf16.mxu0 0
        %1406 = vmatpush1.bf16.msra.mxu0 0
        %1407 = vmatprep.subr.bf16.mxu0 0
        %1408 = vmatpush1.bf16.msra.mxu0 0
        %1409 = vmatprep.subr.bf16.mxu0 0
        %1410 = vmatpush1.bf16.msra.mxu0 0
        %1411 = vmatprep.subr.bf16.mxu0 0
        %1412 = vmatpush1.bf16.msra.mxu0 0
        %1413 = vmatprep.subr.bf16.mxu0 0
        %1414 = vmatpush1.bf16.msra.mxu0 0
        %1415 = vmatprep.subr.bf16.mxu0 0
        %1416 = vmatpush1.bf16.msra.mxu0 0
        %1417 = vmatprep.mubr.bf16.mxu0 0
        %1418 = vmatmul.mubr.bf16.gmra.mrb[0].mxu0 %v1384
        %v1419 = vpop.f32.mrb[0].mxu0
        %v1420 = vadd.f32 0.0, %v1419
        %v1421 = vpop.f32.mrb[0].mxu0
        %v1422 = vadd.f32 0.0, %v1421
        %v1423 = vpop.f32.mrb[0].mxu0
        %v1424 = vpop.f32.mrb[0].mxu0
        %1425 = vdwg.mxu0
        %v1428 = vcombine.low %v1420, %v1422
        %v1430 = vunpack.c.l.s4 1966171168
        %v1431 = vunpack.c.0.s8 %v1430
        %v1432 = vlaneseq
        %v1433 = vshrl.u32 %v1432, 7
        %v1434 = vsub.s32 %v1431, %v1433
        %v1435 = vrot.slane %v1428, %v1434
        %v1437 = vunpack.c.l.s4 1966171168
        %v1438 = vunpack.c.0.s8 %v1437
        %v1439 = vlaneseq
        %v1440 = vshrl.u32 %v1439, 7
        %v1441 = vsub.s32 %v1438, %v1440
        %v1442 = vrot.slane %v1435, %v1441
        %v1444 = vadd.f32 %v1383, %v1442
        %v1445 = vlaneseq
        %vm1446 = vcmp.ge.s32.totalorder %v1445, 0
        %vm1447 = vcmp.lt.s32.totalorder %v1445, 256
        %vm1448 = vmand %vm1446, %vm1447
        %1449 = vst.msk [vmem:[#allocation2] sm:$0x3] %vm1448, %v1444
        %1450 = vst.msk [vmem:[#allocation3] sm:$0x1] %vm1371, %v1349
        %p1451 = scmp.eq.s32.totalorder %s37, 1
        // Predicated region
        $region61: #{tpu_custom_call.1} parent=39 // pred_check
          %p1452 = pneg %p1451
        $region62: #{tpu_custom_call.1} parent=39 // pred_check_branch
          %1454 = sbr.rel (%p1452) target = $region64
        $region63: #{tpu_custom_call.1} parent=39 // pred_region
          %v1455 = vld [vmem:[#allocation2] sm:$0x3]
          %1456 = vst.msk [vmem:[%s380] sm:$0x3] %vm1448, %v1455
          %v1457 = vld [vmem:[#allocation3] sm:$0x1]
          %1458 = vst.msk [vmem:[%s411] sm:$0x1] %vm1371, %v1457
          %v1459 = vld [vmem:[#allocation4] sm:$0x1]
          %1460 = vst.msk [vmem:[%s414] sm:$0x1] %vm1371, %v1459
        $region64: #{tpu_custom_call.1} parent=39 // pred_fallthru
          _
        %s1461 = sand.u32 %s170, 1
        %s1462 = scalar_lea.sflag [#allocation8], %s1461
        %s1463 = sand.u32 %s170, 1
        %s1464 = smul.addr %s1463, 2
        %s1465 = scalar_lea.vmem [#allocation11], %s1464
        %s1466 = sand.u32 %s200, 1
        %s1467 = scalar_lea.sflag [#allocation13], %s1466
        %s1468 = sand.u32 %s200, 1
        %s1469 = scalar_lea.vmem [#allocation12], %s1468
        %p1470 = scmp.lt.s32.totalorder %s36, 1
        %s1471 = scalar_select %p1470, %s36, 1
        %s1472 = scalar_lea.vmem %s7, %s1471
        %p1473 = scmp.lt.s32.totalorder %s36, 1
        %s1474 = scalar_select %p1473, %s36, 1
        %s1475 = scalar_lea.vmem %s8, %s1474
        // Predicated region
        $region65: #{tpu_custom_call.1} parent=39 // pred_check
          %p1476 = pneg %p180
        $region66: #{tpu_custom_call.1} parent=39 // pred_check_branch
          %1478 = sbr.rel (%p1476) target = $region68
        $region67: #{tpu_custom_call.1} parent=39 // pred_region
          %s1480 = ssub.s32 32, 32
          %1481 = vsyncadd %s1462, %s1480
          %s1482 = smul.addr %s36, 2
          %s1483 = smul.addr %s1482, 16
          %s1484 = scalar_lea.hbm %s5, %s1483
          %s1486 = sshll.u32 %s1465, 4
          %s1487 = int_to_ptr.vmem [resolvable:$true] %s1486
          %1489 = dma.vmem_to_hbm [thread:$0]  %s1487, 32, %s1484, %s1462
        $region68: #{tpu_custom_call.1} parent=39 // pred_fallthru
          _
        // Predicated region
        $region69: #{tpu_custom_call.1} parent=39 // pred_check
          %p1490 = pneg %p210
        $region70: #{tpu_custom_call.1} parent=39 // pred_check_branch
          %1492 = sbr.rel (%p1490) target = $region72
        $region71: #{tpu_custom_call.1} parent=39 // pred_region
          %s1493 = smul.u32 %s36, 2
          %s1494 = sadd.s32 %s1493, %s37
          %s1496 = ssub.s32 16, 16
          %1497 = vsyncadd %s1467, %s1496
          %s1498 = smul.addr %s1494, 16
          %s1499 = scalar_lea.hbm %s6, %s1498
          %s1501 = sshll.u32 %s1469, 4
          %s1502 = int_to_ptr.vmem [resolvable:$true] %s1501
          %1504 = dma.vmem_to_hbm [thread:$0]  %s1502, 16, %s1499, %s1467
        $region72: #{tpu_custom_call.1} parent=39 // pred_fallthru
          _
        // Predicated region
        $region73: #{tpu_custom_call.1} parent=39 // pred_check
          %p1505 = pneg %p236
        $region74: #{tpu_custom_call.1} parent=39 // pred_check_branch
          %1507 = sbr.rel (%p1505) target = $region76
        $region75: #{tpu_custom_call.1} parent=39 // pred_region
          _
        $region76: #{tpu_custom_call.1} parent=39 // pred_fallthru
          _
        // Predicated region
        $region77: #{tpu_custom_call.1} parent=39 // pred_check
          %p1508 = pneg %p262
        $region78: #{tpu_custom_call.1} parent=39 // pred_check_branch
          %1510 = sbr.rel (%p1508) target = $region80
        $region79: #{tpu_custom_call.1} parent=39 // pred_region
          _
        $region80: #{tpu_custom_call.1} parent=39 // pred_fallthru
          _
      $region40: #{tpu_custom_call.1} parent=5 // pred_fallthru
        _
      %p1511 = scmp.le.s32.totalorder 2, %s27
      // Predicated region
      $region81: #{tpu_custom_call.1} parent=5 // pred_check
        %p1512 = pneg %p1511
      $region82: #{tpu_custom_call.1} parent=5 // pred_check_branch
        %1514 = sbr.rel (%p1512) target = $region84
      $region83: #{tpu_custom_call.1} parent=5 // pred_region
        %s1515 = ssub.s32 %s27, 2
        // Predicated region
        $region85: #{tpu_custom_call.1} parent=83 // pred_check
          %p1516 = pneg %p186
        $region86: #{tpu_custom_call.1} parent=83 // pred_check_branch
          %1518 = sbr.rel (%p1516) target = $region88
        $region87: #{tpu_custom_call.1} parent=83 // pred_region
          %s1519 = sand.u32 %s171, 1
          %s1520 = scalar_lea.sflag [#allocation8], %s1519
          %s1521 = sand.u32 %s171, 1
          %s1522 = smul.addr %s1521, 2
          %s1523 = scalar_lea.vmem [#allocation11], %s1522
          %1524 = dma.done %s1520, 32
        $region88: #{tpu_custom_call.1} parent=83 // pred_fallthru
          _
        // Predicated region
        $region89: #{tpu_custom_call.1} parent=83 // pred_check
          %p1525 = pneg %p216
        $region90: #{tpu_custom_call.1} parent=83 // pred_check_branch
          %1527 = sbr.rel (%p1525) target = $region92
        $region91: #{tpu_custom_call.1} parent=83 // pred_region
          %s1528 = sand.u32 %s201, 1
          %s1529 = scalar_lea.sflag [#allocation13], %s1528
          %s1530 = sand.u32 %s201, 1
          %s1531 = scalar_lea.vmem [#allocation12], %s1530
          %1532 = dma.done %s1529, 16
        $region92: #{tpu_custom_call.1} parent=83 // pred_fallthru
          _
        // Predicated region
        $region93: #{tpu_custom_call.1} parent=83 // pred_check
          %p1533 = pneg %p242
        $region94: #{tpu_custom_call.1} parent=83 // pred_check_branch
          %1535 = sbr.rel (%p1533) target = $region96
        $region95: #{tpu_custom_call.1} parent=83 // pred_region
          %p1536 = scmp.lt.s32.totalorder %s38, 1
          %s1537 = scalar_select %p1536, %s38, 1
          %s1538 = scalar_lea.vmem %s7, %s1537
        $region96: #{tpu_custom_call.1} parent=83 // pred_fallthru
          _
        // Predicated region
        $region97: #{tpu_custom_call.1} parent=83 // pred_check
          %p1539 = pneg %p268
        $region98: #{tpu_custom_call.1} parent=83 // pred_check_branch
          %1541 = sbr.rel (%p1539) target = $region100
        $region99: #{tpu_custom_call.1} parent=83 // pred_region
          %p1542 = scmp.lt.s32.totalorder %s38, 1
          %s1543 = scalar_select %p1542, %s38, 1
          %s1544 = scalar_lea.vmem %s8, %s1543
        $region100: #{tpu_custom_call.1} parent=83 // pred_fallthru
          _
      $region84: #{tpu_custom_call.1} parent=5 // pred_fallthru
        _
    $region6: #{tpu_custom_call.1} parent=1 // loop_footer
      %s31 = sadd.s32 1, %s27
    $region7: #{tpu_custom_call.1} parent=1 // loop_footer_branch
      %26 = sbr.rel target = $region3
    $region8: #{tpu_custom_call.1} parent=1 // loop_exit
      _
    %1545 = vsyncpa [#allocation7], 1
    %s1546 = scalar_lea.sflag [#allocation7], 1
    %1547 = vsyncpa %s1546, 1
    %1548 = vsyncpa [#allocation10], 1
    %1549 = vsyncpa [#allocation8], 1
    %s1550 = scalar_lea.sflag [#allocation8], 1
    %1551 = vsyncpa %s1550, 1
    %1552 = vsyncpa [#allocation13], 1
    %s1553 = scalar_lea.sflag [#allocation13], 1
    %1554 = vsyncpa %s1553, 1

</llo_original>
